<compile_context>
chip_gen: v7x
topology: tpu7x:2x2x1
jax: 0.10.0
libtpu: 0.0.40
codegen_flags: <defaults>
</compile_context>

<pallas_src>
import jax
import jax.numpy as jnp
from jax import lax
from jax.experimental import pallas as pl
from jax.experimental.pallas import tpu as pltpu


_VMEM = pl.BlockSpec(memory_space=pltpu.MemorySpace.VMEM)
_SMEM = pl.BlockSpec(memory_space=pltpu.MemorySpace.SMEM)


# ----------------------------------------------------------------------------
# Fused kernel: embedding gather + num_layers x RNN + FC + sigmoid
# ----------------------------------------------------------------------------
def make_fused_kernel(num_layers, T, Bp):
    """Build the fused kernel for static (num_layers, T, padded batch Bp)."""

    def kernel(tok_ref, embed_ref, *refs):
        # refs layout:
        #   [w_ih_t, w_hh_t, b] * num_layers, w_fc_t, b_fc, out_ref,
        #   emb_scratch (T*Bp, E), proj_scratch (T*Bp, H), hid_scratch (T*Bp, H)
        layer_refs = [refs[3 * l: 3 * l + 3] for l in range(num_layers)]
        w_fc_ref = refs[3 * num_layers]
        b_fc_ref = refs[3 * num_layers + 1]
        out_ref = refs[3 * num_layers + 2]
        emb_s = refs[3 * num_layers + 3]
        proj_s = refs[3 * num_layers + 4]
        hid_s = refs[3 * num_layers + 5]

        # ---- Embedding lookup: per-row id gather (token ids live in SMEM).
        # Row r = t * Bp + b  (time-major, batch padded to sublane tile).
        def gather_row(r, carry):
            tok = tok_ref[r]                                   # SMEM scalar read
            emb_s[pl.ds(r, 1), :] = embed_ref[pl.ds(tok, 1), :]
            return carry

        lax.fori_loop(0, T * Bp, gather_row, 0)

        seq_ref = emb_s
        h = None
        for l, (w_ih_ref, w_hh_ref, b_ref) in enumerate(layer_refs):
            keep_seq = (l + 1) < num_layers

            # Hoisted input projection for all timesteps (single MXU push),
            # bias folded in; parked in VMEM scratch so it is not carried in
            # vregs across the serial recurrence.
            proj_s[...] = jnp.dot(seq_ref[...], w_ih_ref[...],
                                  preferred_element_type=jnp.float32) + b_ref[...]
            w_hh = w_hh_ref[...]

            # t = 0: h0 == 0  =>  h1 = tanh(proj[0]) (skip the zero matmul).
            h = jnp.tanh(proj_s[0:Bp, :])
            if keep_seq:
                hid_s[0:Bp, :] = h

            def step(t, h_prev, _keep=keep_seq, _w_hh=w_hh):
                off = pl.multiple_of(t * Bp, Bp)               # 8-aligned slice
                pre = proj_s[pl.ds(off, Bp), :] + jnp.dot(
                    h_prev, _w_hh, preferred_element_type=jnp.float32)
                h_new = jnp.tanh(pre)
                if _keep:
                    hid_s[pl.ds(off, Bp), :] = h_new
                return h_new

            h = lax.fori_loop(1, T, step, h, unroll=True)

            # Next layer reads this layer's per-timestep hidden states from
            # VMEM scratch (stays on-chip, no HBM write).
            seq_ref = hid_s

        # TODO(synk): nn.Dropout omitted (eval-mode identity).
        z = jnp.dot(h, w_fc_ref[...],
                    preferred_element_type=jnp.float32) + b_fc_ref[...]
        out_ref[...] = jax.nn.sigmoid(z)

    return kernel


# ----------------------------------------------------------------------------
# Wrapper
# ----------------------------------------------------------------------------
def nsmc_forward(tokens, params):
    B, T = tokens.shape
    Bp = ((B + 7) // 8) * 8                     # pad batch to the 8-row sublane tile
    _V, E = params["embed"].shape
    H, O = params["w_fc_t"].shape
    num_layers = len(params["rnn"])

    # Pad batch with token 0 (padded rows compute garbage, never read back),
    # go time-major and flatten: row index = t * Bp + b.  1-D int32 -> SMEM.
    tok_p = jnp.zeros((Bp, T), jnp.int32).at[:B, :].set(tokens.astype(jnp.int32))
    tok_tm = jnp.transpose(tok_p).reshape(T * Bp)

    inputs = [tok_tm, params["embed"]]
    for layer in params["rnn"]:
        inputs += [layer["w_ih_t"], layer["w_hh_t"], layer["b"]]
    inputs += [params["w_fc_t"], params["b_fc"]]

    out = pl.pallas_call(
        make_fused_kernel(num_layers, T, Bp),
        out_shape=jax.ShapeDtypeStruct((Bp, O), jnp.float32),
        in_specs=[_SMEM] + [_VMEM] * (len(inputs) - 1),
        out_specs=_VMEM,
        scratch_shapes=[
            pltpu.VMEM((T * Bp, E), jnp.float32),   # gathered embeddings
            pltpu.VMEM((T * Bp, H), jnp.float32),   # hoisted input projection
            pltpu.VMEM((T * Bp, H), jnp.float32),   # per-layer hidden-state slab
        ],
    )(*inputs)
    # TODO(synk): at toy size a single TC suffices; for large B add a batch grid
    # axis with dimension_semantics=("parallel",) (v7x 2-TC), and once the vocab
    # no longer fits the scoped VMEM limit keep the embedding table in HBM
    # (memory_space=pl.ANY) and DMA-gather only the T*Bp needed rows.
    return out[:B]


# ----------------------------------------------------------------------------
# Pure-JAX reference + params
# ----------------------------------------------------------------------------
def nsmc_forward_ref(tokens, params):
    x = jnp.take(params["embed"], tokens, axis=0)             # [B, T, E]
    seq = jnp.transpose(x, (1, 0, 2))                          # [T, B, E]
    for layer in params["rnn"]:
        T, B, _ = seq.shape
        H = layer["w_hh_t"].shape[0]
        h = jnp.zeros((B, H), jnp.float32)
        outs = []
        for t in range(T):
            h = jnp.tanh(seq[t] @ layer["w_ih_t"] + h @ layer["w_hh_t"] + layer["b"])
            outs.append(h)
        seq = jnp.stack(outs, axis=0)
    z = seq[-1] @ params["w_fc_t"] + params["b_fc"]
    return jax.nn.sigmoid(z)


def init_params(key, num_vocab, embedding_dim, hidden_dim, num_layers, out_node):
    keys = jax.random.split(key, 3 + 4 * num_layers)
    scale = 1.0 / jnp.sqrt(hidden_dim)
    params = {
        "embed": jax.random.normal(keys[0], (num_vocab, embedding_dim), jnp.float32),
        "rnn": [],
        # PyTorch Linear weight is [out, in]; store the transpose [in, out].
        "w_fc_t": jax.random.uniform(keys[1], (hidden_dim, out_node), jnp.float32,
                                     -scale, scale),
        "b_fc": jax.random.uniform(keys[2], (1, out_node), jnp.float32, -scale, scale),
    }
    for l in range(num_layers):
        k = keys[3 + 4 * l: 3 + 4 * (l + 1)]
        in_dim = embedding_dim if l == 0 else hidden_dim
        # nn.RNN weights are [H, in] / [H, H]; store transposes for right-matmul.
        w_ih_t = jax.random.uniform(k[0], (in_dim, hidden_dim), jnp.float32, -scale, scale)
        w_hh_t = jax.random.uniform(k[1], (hidden_dim, hidden_dim), jnp.float32, -scale, scale)
        b_ih = jax.random.uniform(k[2], (1, hidden_dim), jnp.float32, -scale, scale)
        b_hh = jax.random.uniform(k[3], (1, hidden_dim), jnp.float32, -scale, scale)
        params["rnn"].append({"w_ih_t": w_ih_t, "w_hh_t": w_hh_t, "b": b_ih + b_hh})
    return params


if __name__ == "__main__":
    NUM_VOCAB, EMBED_DIM, HIDDEN_DIM = 100, 32, 32
    NUM_LAYERS, OUT_NODE = 2, 2
    B, T = 2, 8

    key = jax.random.PRNGKey(0)
    k_param, k_tok = jax.random.split(key)
    params = init_params(k_param, NUM_VOCAB, EMBED_DIM, HIDDEN_DIM, NUM_LAYERS, OUT_NODE)
    tokens = jax.random.randint(k_tok, (B, T), 0, NUM_VOCAB, dtype=jnp.int32)

    fwd = jax.jit(nsmc_forward)
    out = jax.block_until_ready(fwd(tokens, params))

    ref = jax.block_until_ready(nsmc_forward_ref(tokens, params))
    assert out.shape == (B, OUT_NODE)
    assert jnp.allclose(out, ref, atol=1e-5, rtol=1e-5), "Pallas output mismatch vs reference"

    print("KERNEL_OK")
</pallas_src>

<mosaic_0001>
module attributes {stable_mosaic.version = 11 : i64} {
  func.func @kernel(%arg0: memref<64xi32, #tpu.memory_space<smem>>, %arg1: memref<100x32xf32, #tpu.memory_space<vmem>>, %arg2: memref<32x32xf32, #tpu.memory_space<vmem>>, %arg3: memref<32x32xf32, #tpu.memory_space<vmem>>, %arg4: memref<1x32xf32, #tpu.memory_space<vmem>>, %arg5: memref<32x32xf32, #tpu.memory_space<vmem>>, %arg6: memref<32x32xf32, #tpu.memory_space<vmem>>, %arg7: memref<1x32xf32, #tpu.memory_space<vmem>>, %arg8: memref<32x2xf32, #tpu.memory_space<vmem>>, %arg9: memref<1x2xf32, #tpu.memory_space<vmem>>, %arg10: memref<8x2xf32, #tpu.memory_space<vmem>>, %arg11: memref<64x32xf32, #tpu.memory_space<vmem>>, %arg12: memref<64x32xf32, #tpu.memory_space<vmem>>, %arg13: memref<64x32xf32, #tpu.memory_space<vmem>>) attributes {dimension_semantics = [], scalar_prefetch = 0 : i64, scratch_operands = 3 : i64, tpu.core_type = #tpu.core_type<tc>} {
    %c0_i32 = arith.constant 0 : i32
    %c64_i32 = arith.constant 64 : i32
    %0 = arith.addi %c0_i32, %c64_i32 : i32
    %c1_i32 = arith.constant 1 : i32
    scf.for %arg14 = %c0_i32 to %0 step %c1_i32  : i32 {
      %145 = arith.index_cast %arg14 : i32 to index
      %146 = memref.load %arg0[%145] : memref<64xi32, #tpu.memory_space<smem>>
      %147 = arith.index_cast %146 : i32 to index
      %c0_93 = arith.constant 0 : index
      %148 = vector.load %arg1[%147, %c0_93] : memref<100x32xf32, #tpu.memory_space<vmem>>, vector<1x32xf32>
      %149 = arith.index_cast %arg14 : i32 to index
      %c0_94 = arith.constant 0 : index
      %150 = vector.load %arg11[%149, %c0_94] : memref<64x32xf32, #tpu.memory_space<vmem>>, vector<1x32xf32>
      tpu.vector_store %arg11[%149, %c0_94], %148 {strides = array<i32>} : memref<64x32xf32, #tpu.memory_space<vmem>>, vector<1x32xf32>,
    }
    %c64_i32_0 = arith.constant 64 : i32
    %c0 = arith.constant 0 : index
    %c0_1 = arith.constant 0 : index
    %1 = vector.load %arg11[%c0, %c0_1] : memref<64x32xf32, #tpu.memory_space<vmem>>, vector<64x32xf32>
    %c0_2 = arith.constant 0 : index
    %c0_3 = arith.constant 0 : index
    %2 = vector.load %arg2[%c0_2, %c0_3] : memref<32x32xf32, #tpu.memory_space<vmem>>, vector<32x32xf32>
    %cst = arith.constant dense<0.000000e+00> : vector<64x32xf32>
    %3 = tpu.matmul %1, %2, %cst {dimension_numbers = #tpu.dot_dimension_numbers<[1], [0], [0], [1], [0, 0, 1, 1], [], []>} : vector<64x32xf32>, vector<32x32xf32>, vector<64x32xf32> -> vector<64x32xf32>
    %c0_4 = arith.constant 0 : index
    %c0_5 = arith.constant 0 : index
    %4 = vector.load %arg4[%c0_4, %c0_5] : memref<1x32xf32, #tpu.memory_space<vmem>>, vector<1x32xf32>
    %5 = vector.broadcast %4 : vector<1x32xf32> to vector<64x32xf32>
    %6 = arith.addf %3, %5 : vector<64x32xf32>
    %c0_6 = arith.constant 0 : index
    %c0_7 = arith.constant 0 : index
    %7 = vector.load %arg12[%c0_6, %c0_7] : memref<64x32xf32, #tpu.memory_space<vmem>>, vector<64x32xf32>
    tpu.vector_store %arg12[%c0_6, %c0_7], %6 {strides = array<i32>} : memref<64x32xf32, #tpu.memory_space<vmem>>, vector<64x32xf32>,
    %c0_8 = arith.constant 0 : index
    %c0_9 = arith.constant 0 : index
    %8 = vector.load %arg3[%c0_8, %c0_9] : memref<32x32xf32, #tpu.memory_space<vmem>>, vector<32x32xf32>
    %c0_10 = arith.constant 0 : index
    %c0_11 = arith.constant 0 : index
    %9 = vector.load %arg12[%c0_10, %c0_11] : memref<64x32xf32, #tpu.memory_space<vmem>>, vector<8x32xf32>
    %10 = math.tanh %9 : vector<8x32xf32>
    %c0_12 = arith.constant 0 : index
    %c0_13 = arith.constant 0 : index
    %11 = vector.load %arg13[%c0_12, %c0_13] : memref<64x32xf32, #tpu.memory_space<vmem>>, vector<8x32xf32>
    tpu.vector_store %arg13[%c0_12, %c0_13], %10 {strides = array<i32>} : memref<64x32xf32, #tpu.memory_space<vmem>>, vector<8x32xf32>,
    %c1_i32_14 = arith.constant 1 : i32
    %c8_i32 = arith.constant 8 : i32
    %12 = arith.muli %c1_i32_14, %c8_i32 : i32
    %13 = tpu.assume_multiple %12, 8 : i32
    %14 = arith.index_cast %13 : i32 to index
    %c0_15 = arith.constant 0 : index
    %15 = vector.load %arg12[%14, %c0_15] : memref<64x32xf32, #tpu.memory_space<vmem>>, vector<8x32xf32>
    %cst_16 = arith.constant dense<0.000000e+00> : vector<8x32xf32>
    %16 = tpu.matmul %10, %8, %cst_16 {dimension_numbers = #tpu.dot_dimension_numbers<[1], [0], [0], [1], [0, 0, 1, 1], [], []>} : vector<8x32xf32>, vector<32x32xf32>, vector<8x32xf32> -> vector<8x32xf32>
    %17 = arith.addf %15, %16 : vector<8x32xf32>
    %18 = math.tanh %17 : vector<8x32xf32>
    %19 = arith.index_cast %13 : i32 to index
    %c0_17 = arith.constant 0 : index
    %20 = vector.load %arg13[%19, %c0_17] : memref<64x32xf32, #tpu.memory_space<vmem>>, vector<8x32xf32>
    tpu.vector_store %arg13[%19, %c0_17], %18 {strides = array<i32>} : memref<64x32xf32, #tpu.memory_space<vmem>>, vector<8x32xf32>,
    %c2_i32 = arith.constant 2 : i32
    %c8_i32_18 = arith.constant 8 : i32
    %21 = arith.muli %c2_i32, %c8_i32_18 : i32
    %22 = tpu.assume_multiple %21, 8 : i32
    %23 = arith.index_cast %22 : i32 to index
    %c0_19 = arith.constant 0 : index
    %24 = vector.load %arg12[%23, %c0_19] : memref<64x32xf32, #tpu.memory_space<vmem>>, vector<8x32xf32>
    %cst_20 = arith.constant dense<0.000000e+00> : vector<8x32xf32>
    %25 = tpu.matmul %18, %8, %cst_20 {dimension_numbers = #tpu.dot_dimension_numbers<[1], [0], [0], [1], [0, 0, 1, 1], [], []>} : vector<8x32xf32>, vector<32x32xf32>, vector<8x32xf32> -> vector<8x32xf32>
    %26 = arith.addf %24, %25 : vector<8x32xf32>
    %27 = math.tanh %26 : vector<8x32xf32>
    %28 = arith.index_cast %22 : i32 to index
    %c0_21 = arith.constant 0 : index
    %29 = vector.load %arg13[%28, %c0_21] : memref<64x32xf32, #tpu.memory_space<vmem>>, vector<8x32xf32>
    tpu.vector_store %arg13[%28, %c0_21], %27 {strides = array<i32>} : memref<64x32xf32, #tpu.memory_space<vmem>>, vector<8x32xf32>,
    %c3_i32 = arith.constant 3 : i32
    %c8_i32_22 = arith.constant 8 : i32
    %30 = arith.muli %c3_i32, %c8_i32_22 : i32
    %31 = tpu.assume_multiple %30, 8 : i32
    %32 = arith.index_cast %31 : i32 to index
    %c0_23 = arith.constant 0 : index
    %33 = vector.load %arg12[%32, %c0_23] : memref<64x32xf32, #tpu.memory_space<vmem>>, vector<8x32xf32>
    %cst_24 = arith.constant dense<0.000000e+00> : vector<8x32xf32>
    %34 = tpu.matmul %27, %8, %cst_24 {dimension_numbers = #tpu.dot_dimension_numbers<[1], [0], [0], [1], [0, 0, 1, 1], [], []>} : vector<8x32xf32>, vector<32x32xf32>, vector<8x32xf32> -> vector<8x32xf32>
    %35 = arith.addf %33, %34 : vector<8x32xf32>
    %36 = math.tanh %35 : vector<8x32xf32>
    %37 = arith.index_cast %31 : i32 to index
    %c0_25 = arith.constant 0 : index
    %38 = vector.load %arg13[%37, %c0_25] : memref<64x32xf32, #tpu.memory_space<vmem>>, vector<8x32xf32>
    tpu.vector_store %arg13[%37, %c0_25], %36 {strides = array<i32>} : memref<64x32xf32, #tpu.memory_space<vmem>>, vector<8x32xf32>,
    %c4_i32 = arith.constant 4 : i32
    %c8_i32_26 = arith.constant 8 : i32
    %39 = arith.muli %c4_i32, %c8_i32_26 : i32
    %40 = tpu.assume_multiple %39, 8 : i32
    %41 = arith.index_cast %40 : i32 to index
    %c0_27 = arith.constant 0 : index
    %42 = vector.load %arg12[%41, %c0_27] : memref<64x32xf32, #tpu.memory_space<vmem>>, vector<8x32xf32>
    %cst_28 = arith.constant dense<0.000000e+00> : vector<8x32xf32>
    %43 = tpu.matmul %36, %8, %cst_28 {dimension_numbers = #tpu.dot_dimension_numbers<[1], [0], [0], [1], [0, 0, 1, 1], [], []>} : vector<8x32xf32>, vector<32x32xf32>, vector<8x32xf32> -> vector<8x32xf32>
    %44 = arith.addf %42, %43 : vector<8x32xf32>
    %45 = math.tanh %44 : vector<8x32xf32>
    %46 = arith.index_cast %40 : i32 to index
    %c0_29 = arith.constant 0 : index
    %47 = vector.load %arg13[%46, %c0_29] : memref<64x32xf32, #tpu.memory_space<vmem>>, vector<8x32xf32>
    tpu.vector_store %arg13[%46, %c0_29], %45 {strides = array<i32>} : memref<64x32xf32, #tpu.memory_space<vmem>>, vector<8x32xf32>,
    %c5_i32 = arith.constant 5 : i32
    %c8_i32_30 = arith.constant 8 : i32
    %48 = arith.muli %c5_i32, %c8_i32_30 : i32
    %49 = tpu.assume_multiple %48, 8 : i32
    %50 = arith.index_cast %49 : i32 to index
    %c0_31 = arith.constant 0 : index
    %51 = vector.load %arg12[%50, %c0_31] : memref<64x32xf32, #tpu.memory_space<vmem>>, vector<8x32xf32>
    %cst_32 = arith.constant dense<0.000000e+00> : vector<8x32xf32>
    %52 = tpu.matmul %45, %8, %cst_32 {dimension_numbers = #tpu.dot_dimension_numbers<[1], [0], [0], [1], [0, 0, 1, 1], [], []>} : vector<8x32xf32>, vector<32x32xf32>, vector<8x32xf32> -> vector<8x32xf32>
    %53 = arith.addf %51, %52 : vector<8x32xf32>
    %54 = math.tanh %53 : vector<8x32xf32>
    %55 = arith.index_cast %49 : i32 to index
    %c0_33 = arith.constant 0 : index
    %56 = vector.load %arg13[%55, %c0_33] : memref<64x32xf32, #tpu.memory_space<vmem>>, vector<8x32xf32>
    tpu.vector_store %arg13[%55, %c0_33], %54 {strides = array<i32>} : memref<64x32xf32, #tpu.memory_space<vmem>>, vector<8x32xf32>,
    %c6_i32 = arith.constant 6 : i32
    %c8_i32_34 = arith.constant 8 : i32
    %57 = arith.muli %c6_i32, %c8_i32_34 : i32
    %58 = tpu.assume_multiple %57, 8 : i32
    %59 = arith.index_cast %58 : i32 to index
    %c0_35 = arith.constant 0 : index
    %60 = vector.load %arg12[%59, %c0_35] : memref<64x32xf32, #tpu.memory_space<vmem>>, vector<8x32xf32>
    %cst_36 = arith.constant dense<0.000000e+00> : vector<8x32xf32>
    %61 = tpu.matmul %54, %8, %cst_36 {dimension_numbers = #tpu.dot_dimension_numbers<[1], [0], [0], [1], [0, 0, 1, 1], [], []>} : vector<8x32xf32>, vector<32x32xf32>, vector<8x32xf32> -> vector<8x32xf32>
    %62 = arith.addf %60, %61 : vector<8x32xf32>
    %63 = math.tanh %62 : vector<8x32xf32>
    %64 = arith.index_cast %58 : i32 to index
    %c0_37 = arith.constant 0 : index
    %65 = vector.load %arg13[%64, %c0_37] : memref<64x32xf32, #tpu.memory_space<vmem>>, vector<8x32xf32>
    tpu.vector_store %arg13[%64, %c0_37], %63 {strides = array<i32>} : memref<64x32xf32, #tpu.memory_space<vmem>>, vector<8x32xf32>,
    %c7_i32 = arith.constant 7 : i32
    %c8_i32_38 = arith.constant 8 : i32
    %66 = arith.muli %c7_i32, %c8_i32_38 : i32
    %67 = tpu.assume_multiple %66, 8 : i32
    %68 = arith.index_cast %67 : i32 to index
    %c0_39 = arith.constant 0 : index
    %69 = vector.load %arg12[%68, %c0_39] : memref<64x32xf32, #tpu.memory_space<vmem>>, vector<8x32xf32>
    %cst_40 = arith.constant dense<0.000000e+00> : vector<8x32xf32>
    %70 = tpu.matmul %63, %8, %cst_40 {dimension_numbers = #tpu.dot_dimension_numbers<[1], [0], [0], [1], [0, 0, 1, 1], [], []>} : vector<8x32xf32>, vector<32x32xf32>, vector<8x32xf32> -> vector<8x32xf32>
    %71 = arith.addf %69, %70 : vector<8x32xf32>
    %72 = math.tanh %71 : vector<8x32xf32>
    %73 = arith.index_cast %67 : i32 to index
    %c0_41 = arith.constant 0 : index
    %74 = vector.load %arg13[%73, %c0_41] : memref<64x32xf32, #tpu.memory_space<vmem>>, vector<8x32xf32>
    tpu.vector_store %arg13[%73, %c0_41], %72 {strides = array<i32>} : memref<64x32xf32, #tpu.memory_space<vmem>>, vector<8x32xf32>,
    %c7_i32_42 = arith.constant 7 : i32
    %c0_43 = arith.constant 0 : index
    %c0_44 = arith.constant 0 : index
    %75 = vector.load %arg13[%c0_43, %c0_44] : memref<64x32xf32, #tpu.memory_space<vmem>>, vector<64x32xf32>
    %c0_45 = arith.constant 0 : index
    %c0_46 = arith.constant 0 : index
    %76 = vector.load %arg5[%c0_45, %c0_46] : memref<32x32xf32, #tpu.memory_space<vmem>>, vector<32x32xf32>
    %cst_47 = arith.constant dense<0.000000e+00> : vector<64x32xf32>
    %77 = tpu.matmul %75, %76, %cst_47 {dimension_numbers = #tpu.dot_dimension_numbers<[1], [0], [0], [1], [0, 0, 1, 1], [], []>} : vector<64x32xf32>, vector<32x32xf32>, vector<64x32xf32> -> vector<64x32xf32>
    %c0_48 = arith.constant 0 : index
    %c0_49 = arith.constant 0 : index
    %78 = vector.load %arg7[%c0_48, %c0_49] : memref<1x32xf32, #tpu.memory_space<vmem>>, vector<1x32xf32>
    %79 = vector.broadcast %78 : vector<1x32xf32> to vector<64x32xf32>
    %80 = arith.addf %77, %79 : vector<64x32xf32>
    %c0_50 = arith.constant 0 : index
    %c0_51 = arith.constant 0 : index
    %81 = vector.load %arg12[%c0_50, %c0_51] : memref<64x32xf32, #tpu.memory_space<vmem>>, vector<64x32xf32>
    tpu.vector_store %arg12[%c0_50, %c0_51], %80 {strides = array<i32>} : memref<64x32xf32, #tpu.memory_space<vmem>>, vector<64x32xf32>,
    %c0_52 = arith.constant 0 : index
    %c0_53 = arith.constant 0 : index
    %82 = vector.load %arg6[%c0_52, %c0_53] : memref<32x32xf32, #tpu.memory_space<vmem>>, vector<32x32xf32>
    %c0_54 = arith.constant 0 : index
    %c0_55 = arith.constant 0 : index
    %83 = vector.load %arg12[%c0_54, %c0_55] : memref<64x32xf32, #tpu.memory_space<vmem>>, vector<8x32xf32>
    %84 = math.tanh %83 : vector<8x32xf32>
    %c1_i32_56 = arith.constant 1 : i32
    %c8_i32_57 = arith.constant 8 : i32
    %85 = arith.muli %c1_i32_56, %c8_i32_57 : i32
    %86 = tpu.assume_multiple %85, 8 : i32
    %87 = arith.index_cast %86 : i32 to index
    %c0_58 = arith.constant 0 : index
    %88 = vector.load %arg12[%87, %c0_58] : memref<64x32xf32, #tpu.memory_space<vmem>>, vector<8x32xf32>
    %cst_59 = arith.constant dense<0.000000e+00> : vector<8x32xf32>
    %89 = tpu.matmul %84, %82, %cst_59 {dimension_numbers = #tpu.dot_dimension_numbers<[1], [0], [0], [1], [0, 0, 1, 1], [], []>} : vector<8x32xf32>, vector<32x32xf32>, vector<8x32xf32> -> vector<8x32xf32>
    %90 = arith.addf %88, %89 : vector<8x32xf32>
    %91 = math.tanh %90 : vector<8x32xf32>
    %c2_i32_60 = arith.constant 2 : i32
    %c8_i32_61 = arith.constant 8 : i32
    %92 = arith.muli %c2_i32_60, %c8_i32_61 : i32
    %93 = tpu.assume_multiple %92, 8 : i32
    %94 = arith.index_cast %93 : i32 to index
    %c0_62 = arith.constant 0 : index
    %95 = vector.load %arg12[%94, %c0_62] : memref<64x32xf32, #tpu.memory_space<vmem>>, vector<8x32xf32>
    %cst_63 = arith.constant dense<0.000000e+00> : vector<8x32xf32>
    %96 = tpu.matmul %91, %82, %cst_63 {dimension_numbers = #tpu.dot_dimension_numbers<[1], [0], [0], [1], [0, 0, 1, 1], [], []>} : vector<8x32xf32>, vector<32x32xf32>, vector<8x32xf32> -> vector<8x32xf32>
    %97 = arith.addf %95, %96 : vector<8x32xf32>
    %98 = math.tanh %97 : vector<8x32xf32>
    %c3_i32_64 = arith.constant 3 : i32
    %c8_i32_65 = arith.constant 8 : i32
    %99 = arith.muli %c3_i32_64, %c8_i32_65 : i32
    %100 = tpu.assume_multiple %99, 8 : i32
    %101 = arith.index_cast %100 : i32 to index
    %c0_66 = arith.constant 0 : index
    %102 = vector.load %arg12[%101, %c0_66] : memref<64x32xf32, #tpu.memory_space<vmem>>, vector<8x32xf32>
    %cst_67 = arith.constant dense<0.000000e+00> : vector<8x32xf32>
    %103 = tpu.matmul %98, %82, %cst_67 {dimension_numbers = #tpu.dot_dimension_numbers<[1], [0], [0], [1], [0, 0, 1, 1], [], []>} : vector<8x32xf32>, vector<32x32xf32>, vector<8x32xf32> -> vector<8x32xf32>
    %104 = arith.addf %102, %103 : vector<8x32xf32>
    %105 = math.tanh %104 : vector<8x32xf32>
    %c4_i32_68 = arith.constant 4 : i32
    %c8_i32_69 = arith.constant 8 : i32
    %106 = arith.muli %c4_i32_68, %c8_i32_69 : i32
    %107 = tpu.assume_multiple %106, 8 : i32
    %108 = arith.index_cast %107 : i32 to index
    %c0_70 = arith.constant 0 : index
    %109 = vector.load %arg12[%108, %c0_70] : memref<64x32xf32, #tpu.memory_space<vmem>>, vector<8x32xf32>
    %cst_71 = arith.constant dense<0.000000e+00> : vector<8x32xf32>
    %110 = tpu.matmul %105, %82, %cst_71 {dimension_numbers = #tpu.dot_dimension_numbers<[1], [0], [0], [1], [0, 0, 1, 1], [], []>} : vector<8x32xf32>, vector<32x32xf32>, vector<8x32xf32> -> vector<8x32xf32>
    %111 = arith.addf %109, %110 : vector<8x32xf32>
    %112 = math.tanh %111 : vector<8x32xf32>
    %c5_i32_72 = arith.constant 5 : i32
    %c8_i32_73 = arith.constant 8 : i32
    %113 = arith.muli %c5_i32_72, %c8_i32_73 : i32
    %114 = tpu.assume_multiple %113, 8 : i32
    %115 = arith.index_cast %114 : i32 to index
    %c0_74 = arith.constant 0 : index
    %116 = vector.load %arg12[%115, %c0_74] : memref<64x32xf32, #tpu.memory_space<vmem>>, vector<8x32xf32>
    %cst_75 = arith.constant dense<0.000000e+00> : vector<8x32xf32>
    %117 = tpu.matmul %112, %82, %cst_75 {dimension_numbers = #tpu.dot_dimension_numbers<[1], [0], [0], [1], [0, 0, 1, 1], [], []>} : vector<8x32xf32>, vector<32x32xf32>, vector<8x32xf32> -> vector<8x32xf32>
    %118 = arith.addf %116, %117 : vector<8x32xf32>
    %119 = math.tanh %118 : vector<8x32xf32>
    %c6_i32_76 = arith.constant 6 : i32
    %c8_i32_77 = arith.constant 8 : i32
    %120 = arith.muli %c6_i32_76, %c8_i32_77 : i32
    %121 = tpu.assume_multiple %120, 8 : i32
    %122 = arith.index_cast %121 : i32 to index
    %c0_78 = arith.constant 0 : index
    %123 = vector.load %arg12[%122, %c0_78] : memref<64x32xf32, #tpu.memory_space<vmem>>, vector<8x32xf32>
    %cst_79 = arith.constant dense<0.000000e+00> : vector<8x32xf32>
    %124 = tpu.matmul %119, %82, %cst_79 {dimension_numbers = #tpu.dot_dimension_numbers<[1], [0], [0], [1], [0, 0, 1, 1], [], []>} : vector<8x32xf32>, vector<32x32xf32>, vector<8x32xf32> -> vector<8x32xf32>
    %125 = arith.addf %123, %124 : vector<8x32xf32>
    %126 = math.tanh %125 : vector<8x32xf32>
    %c7_i32_80 = arith.constant 7 : i32
    %c8_i32_81 = arith.constant 8 : i32
    %127 = arith.muli %c7_i32_80, %c8_i32_81 : i32
    %128 = tpu.assume_multiple %127, 8 : i32
    %129 = arith.index_cast %128 : i32 to index
    %c0_82 = arith.constant 0 : index
    %130 = vector.load %arg12[%129, %c0_82] : memref<64x32xf32, #tpu.memory_space<vmem>>, vector<8x32xf32>
    %cst_83 = arith.constant dense<0.000000e+00> : vector<8x32xf32>
    %131 = tpu.matmul %126, %82, %cst_83 {dimension_numbers = #tpu.dot_dimension_numbers<[1], [0], [0], [1], [0, 0, 1, 1], [], []>} : vector<8x32xf32>, vector<32x32xf32>, vector<8x32xf32> -> vector<8x32xf32>
    %132 = arith.addf %130, %131 : vector<8x32xf32>
    %133 = math.tanh %132 : vector<8x32xf32>
    %c7_i32_84 = arith.constant 7 : i32
    %c0_85 = arith.constant 0 : index
    %c0_86 = arith.constant 0 : index
    %134 = vector.load %arg8[%c0_85, %c0_86] : memref<32x2xf32, #tpu.memory_space<vmem>>, vector<32x2xf32>
    %cst_87 = arith.constant dense<0.000000e+00> : vector<8x2xf32>
    %135 = tpu.matmul %133, %134, %cst_87 {dimension_numbers = #tpu.dot_dimension_numbers<[1], [0], [0], [1], [0, 0, 1, 1], [], []>} : vector<8x32xf32>, vector<32x2xf32>, vector<8x2xf32> -> vector<8x2xf32>
    %c0_88 = arith.constant 0 : index
    %c0_89 = arith.constant 0 : index
    %136 = vector.load %arg9[%c0_88, %c0_89] : memref<1x2xf32, #tpu.memory_space<vmem>>, vector<1x2xf32>
    %137 = vector.broadcast %136 : vector<1x2xf32> to vector<8x2xf32>
    %138 = arith.addf %135, %137 : vector<8x2xf32>
    %139 = arith.negf %138 : vector<8x2xf32>
    %140 = math.exp %139 : vector<8x2xf32>
    %cst_90 = arith.constant 1.000000e+00 : f32
    %141 = vector.broadcast %cst_90 : f32 to vector<8x2xf32>
    %142 = arith.addf %141, %140 : vector<8x2xf32>
    %143 = arith.divf %141, %142 : vector<8x2xf32>
    %c0_91 = arith.constant 0 : index
    %c0_92 = arith.constant 0 : index
    %144 = vector.load %arg10[%c0_91, %c0_92] : memref<8x2xf32, #tpu.memory_space<vmem>>, vector<8x2xf32>
    tpu.vector_store %arg10[%c0_91, %c0_92], %143 {strides = array<i32>} : memref<8x2xf32, #tpu.memory_space<vmem>>, vector<8x2xf32>,
    return
  }
}

</mosaic_0001>

<llo_original>
// kernel: nsmc_forward.1
$region0: #{nsmc_forward.1}
  #allocation0 [shape = 'u32[]', space=smem, size = 0x4, offset = 0x4, fixed_abs, tag = 'smem constant byte address 0x4 - core index']
  #allocation1 [shape = 'u32[144,128]{1,0:T(1,128)}', space=vmem, size = 0x12000, scoped, tag = 'internal scratch']
  #allocation2 [shape = 'f32[64,32]{1,0:T(8,128)}', space=vmem, size = 0x8000, scoped, tag = 'scratch operand']
  #allocation3 [shape = 'f32[64,32]{1,0:T(8,128)}', space=vmem, size = 0x8000, scoped, tag = 'scratch operand']
  #allocation4 [shape = 'f32[64,32]{1,0:T(8,128)}', space=vmem, size = 0x8000, scoped, tag = 'scratch operand']
  %s0 = inlined_call_operand.vmem [shape: s32[64], index: 0, kind: input, shape index: {}]
  %s1 = inlined_call_operand.vmem [shape: f32[100,32], index: 1, kind: input, shape index: {}]
  %s2 = inlined_call_operand.vmem [shape: f32[32,32], index: 2, kind: input, shape index: {}]
  %s3 = inlined_call_operand.vmem [shape: f32[32,32], index: 3, kind: input, shape index: {}]
  %s4 = inlined_call_operand.vmem [shape: f32[1,32], index: 4, kind: input, shape index: {}]
  %s5 = inlined_call_operand.vmem [shape: f32[32,32], index: 5, kind: input, shape index: {}]
  %s6 = inlined_call_operand.vmem [shape: f32[32,32], index: 6, kind: input, shape index: {}]
  %s7 = inlined_call_operand.vmem [shape: f32[1,32], index: 7, kind: input, shape index: {}]
  %s8 = inlined_call_operand.vmem [shape: f32[32,2], index: 8, kind: input, shape index: {}]
  %s9 = inlined_call_operand.vmem [shape: f32[1,2], index: 9, kind: input, shape index: {}]
  %s10 = inlined_call_operand.vmem [shape: f32[8,2], index: 10, kind: output, shape index: {}]
  %s11 = sld [smem:[#allocation0]]
  $region61: #{nsmc_forward.1} parent=0
    _
  %s13 = ssub.s32 1, %s11
  %s14 = scalar_select 0, %s13, %s11
  $region1: #{nsmc_forward.1} parent=0
    #allocation5 [shape = 'u8[512]{0}', space=smem, size = 0x200, scoped, tag = 'input window, operand 0, single buffered']
    #allocation6 [shape = 's32[1]{0}', space=sflag, size = 0x4, scoped, tag = 'scoped memory for nsmc_forward.1']
    %15 = vsyncpa [#allocation6], 0
    // Predicated region
    $region2: #{nsmc_forward.1} parent=1 // pred_check
      _
    $region3: #{nsmc_forward.1} parent=1 // pred_check_branch
      %17 = sbr.rel (0) target = $region5
    $region4: #{nsmc_forward.1} parent=1 // pred_region
      %s19 = ssub.s32 16, 16
      %20 = vsyncadd [#allocation6], %s19
      %s22 = sshll.u32 %s0, 4
      %s23 = int_to_ptr.vmem [resolvable:$true] %s22
      %25 = dma.vmem_to_smem %s23, 16, [#allocation5], [#allocation6]
    $region5: #{nsmc_forward.1} parent=1 // pred_fallthru
      _
    // Predicated region
    $region6: #{nsmc_forward.1} parent=1 // pred_check
      _
    $region7: #{nsmc_forward.1} parent=1 // pred_check_branch
      %27 = sbr.rel (0) target = $region9
    $region8: #{nsmc_forward.1} parent=1 // pred_region
      _
    $region9: #{nsmc_forward.1} parent=1 // pred_fallthru
      _
    // Predicated region
    $region10: #{nsmc_forward.1} parent=1 // pred_check
      _
    $region11: #{nsmc_forward.1} parent=1 // pred_check_branch
      %29 = sbr.rel (0) target = $region13
    $region12: #{nsmc_forward.1} parent=1 // pred_region
      _
    $region13: #{nsmc_forward.1} parent=1 // pred_fallthru
      _
    // Predicated region
    $region14: #{nsmc_forward.1} parent=1 // pred_check
      _
    $region15: #{nsmc_forward.1} parent=1 // pred_check_branch
      %31 = sbr.rel (0) target = $region17
    $region16: #{nsmc_forward.1} parent=1 // pred_region
      _
    $region17: #{nsmc_forward.1} parent=1 // pred_fallthru
      _
    // Predicated region
    $region18: #{nsmc_forward.1} parent=1 // pred_check
      _
    $region19: #{nsmc_forward.1} parent=1 // pred_check_branch
      %33 = sbr.rel (0) target = $region21
    $region20: #{nsmc_forward.1} parent=1 // pred_region
      _
    $region21: #{nsmc_forward.1} parent=1 // pred_fallthru
      _
    // Predicated region
    $region22: #{nsmc_forward.1} parent=1 // pred_check
      _
    $region23: #{nsmc_forward.1} parent=1 // pred_check_branch
      %35 = sbr.rel (0) target = $region25
    $region24: #{nsmc_forward.1} parent=1 // pred_region
      _
    $region25: #{nsmc_forward.1} parent=1 // pred_fallthru
      _
    // Predicated region
    $region26: #{nsmc_forward.1} parent=1 // pred_check
      _
    $region27: #{nsmc_forward.1} parent=1 // pred_check_branch
      %37 = sbr.rel (0) target = $region29
    $region28: #{nsmc_forward.1} parent=1 // pred_region
      _
    $region29: #{nsmc_forward.1} parent=1 // pred_fallthru
      _
    // Predicated region
    $region30: #{nsmc_forward.1} parent=1 // pred_check
      _
    $region31: #{nsmc_forward.1} parent=1 // pred_check_branch
      %39 = sbr.rel (0) target = $region33
    $region32: #{nsmc_forward.1} parent=1 // pred_region
      _
    $region33: #{nsmc_forward.1} parent=1 // pred_fallthru
      _
    // Predicated region
    $region34: #{nsmc_forward.1} parent=1 // pred_check
      _
    $region35: #{nsmc_forward.1} parent=1 // pred_check_branch
      %41 = sbr.rel (0) target = $region37
    $region36: #{nsmc_forward.1} parent=1 // pred_region
      _
    $region37: #{nsmc_forward.1} parent=1 // pred_fallthru
      _
    // Predicated region
    $region38: #{nsmc_forward.1} parent=1 // pred_check
      _
    $region39: #{nsmc_forward.1} parent=1 // pred_check_branch
      %43 = sbr.rel (0) target = $region41
    $region40: #{nsmc_forward.1} parent=1 // pred_region
      _
    $region41: #{nsmc_forward.1} parent=1 // pred_fallthru
      _
    // Predicated region
    $region42: #{nsmc_forward.1} parent=1 // pred_check
      _
    $region43: #{nsmc_forward.1} parent=1 // pred_check_branch
      %45 = sbr.rel (0) target = $region45
    $region44: #{nsmc_forward.1} parent=1 // pred_region
      %46 = dma.done [#allocation6], 16
    $region45: #{nsmc_forward.1} parent=1 // pred_fallthru
      _
    %47 = sfence
    loop: start=0, step=1, limit=64
    $region46: #{nsmc_forward.1} parent=1 // loop_pre_header
      _
    $region47: #{nsmc_forward.1} parent=1 // loop_header
      %s49 = sphi 0, %s53
      %p50 = scmp.ge.s32.totalorder %s49, 64
    $region48: #{nsmc_forward.1} parent=1 // loop_header_branch
      %52 = sbr.rel (%p50) target = $region52
    $region49: #{nsmc_forward.1} parent=1 // loop_body
      %s54 = sld [smem:[#allocation5 + %s49]]
      %s55 = scalar_lea.vmem %s1, %s54
      %v56 = vld [vmem:[%s55] sm:$0x1]
      %s57 = scalar_lea.vmem [#allocation2], %s49
      %vm58 = vcmask 253952
      %59 = vst.msk [vmem:[%s57] sm:$0x1] %vm58, %v56
    $region50: #{nsmc_forward.1} parent=1 // loop_footer
      %s53 = sadd.s32 1, %s49
    $region51: #{nsmc_forward.1} parent=1 // loop_footer_branch
      %48 = sbr.rel target = $region47
    $region52: #{nsmc_forward.1} parent=1 // loop_exit
      _
    %v60 = vld [vmem:[#allocation2] sm:$0xff]
    %v61 = vld [vmem:[#allocation2 + $0x8] sm:$0xff]
    %v62 = vld [vmem:[#allocation2 + $0x10] sm:$0xff]
    %v63 = vld [vmem:[#allocation2 + $0x18] sm:$0xff]
    %v64 = vld [vmem:[#allocation2 + $0x20] sm:$0xff]
    %v65 = vld [vmem:[#allocation2 + $0x28] sm:$0xff]
    %v66 = vld [vmem:[#allocation2 + $0x30] sm:$0xff]
    %v67 = vld [vmem:[#allocation2 + $0x38] sm:$0xff]
    %v68 = vld [vmem:[%s2] sm:$0xff]
    %v69 = vld [vmem:[%s2 + $0x8] sm:$0xff]
    %v70 = vld [vmem:[%s2 + $0x10] sm:$0xff]
    %v71 = vld [vmem:[%s2 + $0x18] sm:$0xff]
    %v72 = vld [vmem:[%s4] sm:$0x1]
    %v74 = vlaneseq
    %v75 = vshrl.u32 %v74, 7
    %v76 = vsub.s32 0, %v75
    %v77 = vrot.slane %v72, %v76
    %vm79 = vcmask 261120
    %v81 = vsel %vm79, %v60, 0
    %v84 = vsel %vm79, %v61, 0
    %v87 = vsel %vm79, %v62, 0
    %v90 = vsel %vm79, %v63, 0
    %v93 = vsel %vm79, %v64, 0
    %v96 = vsel %vm79, %v65, 0
    %v99 = vsel %vm79, %v66, 0
    %v102 = vsel %vm79, %v67, 0
    %104 = vmatprep.subr.mxu0 0.0
    %105 = vmatpush1.msra.mxu0 %v68
    %106 = vmatprep.subr.mxu0 0.0
    %107 = vmatpush1.msra.mxu0 %v69
    %108 = vmatprep.subr.mxu0 0.0
    %109 = vmatpush1.msra.mxu0 %v70
    %110 = vmatprep.subr.mxu0 0.0
    %111 = vmatpush1.msra.mxu0 %v71
    %112 = vmatprep.subr.mxu0 0.0
    %113 = vmatpush1.msra.mxu0 0.0
    %114 = vmatprep.subr.mxu0 0.0
    %115 = vmatpush1.msra.mxu0 0.0
    %116 = vmatprep.subr.mxu0 0.0
    %117 = vmatpush1.msra.mxu0 0.0
    %118 = vmatprep.subr.mxu0 0.0
    %119 = vmatpush1.msra.mxu0 0.0
    %120 = vmatprep.subr.mxu0 0.0
    %121 = vmatpush1.msra.mxu0 0.0
    %122 = vmatprep.subr.mxu0 0.0
    %123 = vmatpush1.msra.mxu0 0.0
    %124 = vmatprep.subr.mxu0 0.0
    %125 = vmatpush1.msra.mxu0 0.0
    %126 = vmatprep.subr.mxu0 0.0
    %127 = vmatpush1.msra.mxu0 0.0
    %128 = vmatprep.subr.mxu0 0.0
    %129 = vmatpush1.msra.mxu0 0.0
    %130 = vmatprep.subr.mxu0 0.0
    %131 = vmatpush1.msra.mxu0 0.0
    %132 = vmatprep.subr.mxu0 0.0
    %133 = vmatpush1.msra.mxu0 0.0
    %134 = vmatprep.subr.mxu0 0.0
    %135 = vmatpush1.msra.mxu0 0.0
    %136 = vmatprep.subr.mxu0 0.0
    %137 = vmatpush1.msra.mxu0 0.0
    %138 = vmatprep.subr.mxu0 0.0
    %139 = vmatpush1.msra.mxu0 0.0
    %140 = vmatprep.subr.mxu0 0.0
    %141 = vmatpush1.msra.mxu0 0.0
    %142 = vmatprep.subr.mxu0 0.0
    %143 = vmatpush1.msra.mxu0 0.0
    %144 = vmatprep.subr.mxu0 0.0
    %145 = vmatpush1.msra.mxu0 0.0
    %146 = vmatprep.subr.mxu0 0.0
    %147 = vmatpush1.msra.mxu0 0.0
    %148 = vmatprep.subr.mxu0 0.0
    %149 = vmatpush1.msra.mxu0 0.0
    %150 = vmatprep.subr.mxu0 0.0
    %151 = vmatpush1.msra.mxu0 0.0
    %152 = vmatprep.subr.mxu0 0.0
    %153 = vmatpush1.msra.mxu0 0.0
    %154 = vmatprep.subr.mxu0 0.0
    %155 = vmatpush1.msra.mxu0 0.0
    %156 = vmatprep.subr.mxu0 0.0
    %157 = vmatpush1.msra.mxu0 0.0
    %158 = vmatprep.subr.mxu0 0.0
    %159 = vmatpush1.msra.mxu0 0.0
    %160 = vmatprep.subr.mxu0 0.0
    %161 = vmatpush1.msra.mxu0 0.0
    %162 = vmatprep.subr.mxu0 0.0
    %163 = vmatpush1.msra.mxu0 0.0
    %164 = vmatprep.subr.mxu0 0.0
    %165 = vmatpush1.msra.mxu0 0.0
    %166 = vmatprep.subr.mxu0 0.0
    %167 = vmatpush1.msra.mxu0 0.0
    %168 = vmatprep.mubr.f32.mxu0 0.0
    %169 = vmatmul.mubr.f32.gmra.mrb[0].mxu0 %v81
    %v170 = vpop.f32.mrb[0].mxu0
    %v171 = vadd.f32 %v77, %v170
    %v172 = vpop.f32.mrb[0].mxu0
    %173 = vmatprep.mubr.f32.mxu0 0.0
    %174 = vmatmul.mubr.f32.gmra.mrb[0].mxu0 %v84
    %v175 = vpop.f32.mrb[0].mxu0
    %v176 = vadd.f32 %v77, %v175
    %v177 = vpop.f32.mrb[0].mxu0
    %178 = vmatprep.mubr.f32.mxu0 0.0
    %179 = vmatmul.mubr.f32.gmra.mrb[0].mxu0 %v87
    %v180 = vpop.f32.mrb[0].mxu0
    %v181 = vadd.f32 %v77, %v180
    %v182 = vpop.f32.mrb[0].mxu0
    %183 = vmatprep.mubr.f32.mxu0 0.0
    %184 = vmatmul.mubr.f32.gmra.mrb[0].mxu0 %v90
    %v185 = vpop.f32.mrb[0].mxu0
    %v186 = vadd.f32 %v77, %v185
    %v187 = vpop.f32.mrb[0].mxu0
    %188 = vmatprep.mubr.f32.mxu0 0.0
    %189 = vmatmul.mubr.f32.gmra.mrb[0].mxu0 %v93
    %v190 = vpop.f32.mrb[0].mxu0
    %v191 = vadd.f32 %v77, %v190
    %v192 = vpop.f32.mrb[0].mxu0
    %193 = vmatprep.mubr.f32.mxu0 0.0
    %194 = vmatmul.mubr.f32.gmra.mrb[0].mxu0 %v96
    %v195 = vpop.f32.mrb[0].mxu0
    %v196 = vadd.f32 %v77, %v195
    %v197 = vpop.f32.mrb[0].mxu0
    %198 = vmatprep.mubr.f32.mxu0 0.0
    %199 = vmatmul.mubr.f32.gmra.mrb[0].mxu0 %v99
    %v200 = vpop.f32.mrb[0].mxu0
    %v201 = vadd.f32 %v77, %v200
    %v202 = vpop.f32.mrb[0].mxu0
    %203 = vmatprep.mubr.f32.mxu0 0.0
    %204 = vmatmul.mubr.f32.gmra.mrb[0].mxu0 %v102
    %v205 = vpop.f32.mrb[0].mxu0
    %v206 = vadd.f32 %v77, %v205
    %v207 = vpop.f32.mrb[0].mxu0
    %208 = vdwg.mxu0
    %209 = vst.msk [vmem:[#allocation3] sm:$0xff] %vm79, %v171
    %210 = vst.msk [vmem:[#allocation3 + $0x8] sm:$0xff] %vm79, %v176
    %211 = vst.msk [vmem:[#allocation3 + $0x10] sm:$0xff] %vm79, %v181
    %212 = vst.msk [vmem:[#allocation3 + $0x18] sm:$0xff] %vm79, %v186
    %213 = vst.msk [vmem:[#allocation3 + $0x20] sm:$0xff] %vm79, %v191
    %214 = vst.msk [vmem:[#allocation3 + $0x28] sm:$0xff] %vm79, %v196
    %215 = vst.msk [vmem:[#allocation3 + $0x30] sm:$0xff] %vm79, %v201
    %216 = vst.msk [vmem:[#allocation3 + $0x38] sm:$0xff] %vm79, %v206
    %v217 = vld [vmem:[%s3] sm:$0xff]
    %v218 = vld [vmem:[%s3 + $0x8] sm:$0xff]
    %v219 = vld [vmem:[%s3 + $0x10] sm:$0xff]
    %v220 = vld [vmem:[%s3 + $0x18] sm:$0xff]
    %v221 = vld [vmem:[#allocation3] sm:$0xff]
    %v222 = vtanh.pop %v221
    %223 = vst.msk [vmem:[#allocation4] sm:$0xff] %vm79, %v222
    %s224 = scalar_lea.vmem [#allocation3], 8
    %v225 = vld [vmem:[%s224] sm:$0xff]
    %v227 = vsel %vm79, %v222, 0
    %229 = vmatprep.subr.mxu0 0.0
    %230 = vmatpush1.msra.mxu0 %v217
    %231 = vmatprep.subr.mxu0 0.0
    %232 = vmatpush1.msra.mxu0 %v218
    %233 = vmatprep.subr.mxu0 0.0
    %234 = vmatpush1.msra.mxu0 %v219
    %235 = vmatprep.subr.mxu0 0.0
    %236 = vmatpush1.msra.mxu0 %v220
    %237 = vmatprep.subr.mxu0 0.0
    %238 = vmatpush1.msra.mxu0 0.0
    %239 = vmatprep.subr.mxu0 0.0
    %240 = vmatpush1.msra.mxu0 0.0
    %241 = vmatprep.subr.mxu0 0.0
    %242 = vmatpush1.msra.mxu0 0.0
    %243 = vmatprep.subr.mxu0 0.0
    %244 = vmatpush1.msra.mxu0 0.0
    %245 = vmatprep.subr.mxu0 0.0
    %246 = vmatpush1.msra.mxu0 0.0
    %247 = vmatprep.subr.mxu0 0.0
    %248 = vmatpush1.msra.mxu0 0.0
    %249 = vmatprep.subr.mxu0 0.0
    %250 = vmatpush1.msra.mxu0 0.0
    %251 = vmatprep.subr.mxu0 0.0
    %252 = vmatpush1.msra.mxu0 0.0
    %253 = vmatprep.subr.mxu0 0.0
    %254 = vmatpush1.msra.mxu0 0.0
    %255 = vmatprep.subr.mxu0 0.0
    %256 = vmatpush1.msra.mxu0 0.0
    %257 = vmatprep.subr.mxu0 0.0
    %258 = vmatpush1.msra.mxu0 0.0
    %259 = vmatprep.subr.mxu0 0.0
    %260 = vmatpush1.msra.mxu0 0.0
    %261 = vmatprep.subr.mxu0 0.0
    %262 = vmatpush1.msra.mxu0 0.0
    %263 = vmatprep.subr.mxu0 0.0
    %264 = vmatpush1.msra.mxu0 0.0
    %265 = vmatprep.subr.mxu0 0.0
    %266 = vmatpush1.msra.mxu0 0.0
    %267 = vmatprep.subr.mxu0 0.0
    %268 = vmatpush1.msra.mxu0 0.0
    %269 = vmatprep.subr.mxu0 0.0
    %270 = vmatpush1.msra.mxu0 0.0
    %271 = vmatprep.subr.mxu0 0.0
    %272 = vmatpush1.msra.mxu0 0.0
    %273 = vmatprep.subr.mxu0 0.0
    %274 = vmatpush1.msra.mxu0 0.0
    %275 = vmatprep.subr.mxu0 0.0
    %276 = vmatpush1.msra.mxu0 0.0
    %277 = vmatprep.subr.mxu0 0.0
    %278 = vmatpush1.msra.mxu0 0.0
    %279 = vmatprep.subr.mxu0 0.0
    %280 = vmatpush1.msra.mxu0 0.0
    %281 = vmatprep.subr.mxu0 0.0
    %282 = vmatpush1.msra.mxu0 0.0
    %283 = vmatprep.subr.mxu0 0.0
    %284 = vmatpush1.msra.mxu0 0.0
    %285 = vmatprep.subr.mxu0 0.0
    %286 = vmatpush1.msra.mxu0 0.0
    %287 = vmatprep.subr.mxu0 0.0
    %288 = vmatpush1.msra.mxu0 0.0
    %289 = vmatprep.subr.mxu0 0.0
    %290 = vmatpush1.msra.mxu0 0.0
    %291 = vmatprep.subr.mxu0 0.0
    %292 = vmatpush1.msra.mxu0 0.0
    %293 = vmatprep.mubr.f32.mxu0 0.0
    %294 = vmatmul.mubr.f32.gmra.mrb[0].mxu0 %v227
    %v295 = vpop.f32.mrb[0].mxu0
    %v296 = vadd.f32 0.0, %v295
    %v297 = vpop.f32.mrb[0].mxu0
    %298 = vdwg.mxu0
    %v299 = vadd.f32 %v225, %v296
    %v300 = vtanh.pop %v299
    %s301 = scalar_lea.vmem [#allocation4], 8
    %302 = vst.msk [vmem:[%s301] sm:$0xff] %vm79, %v300
    %s303 = scalar_lea.vmem [#allocation3], 16
    %v304 = vld [vmem:[%s303] sm:$0xff]
    %v306 = vsel %vm79, %v300, 0
    %308 = vmatprep.subr.mxu0 0.0
    %309 = vmatpush1.msra.mxu0 %v217
    %310 = vmatprep.subr.mxu0 0.0
    %311 = vmatpush1.msra.mxu0 %v218
    %312 = vmatprep.subr.mxu0 0.0
    %313 = vmatpush1.msra.mxu0 %v219
    %314 = vmatprep.subr.mxu0 0.0
    %315 = vmatpush1.msra.mxu0 %v220
    %316 = vmatprep.subr.mxu0 0.0
    %317 = vmatpush1.msra.mxu0 0.0
    %318 = vmatprep.subr.mxu0 0.0
    %319 = vmatpush1.msra.mxu0 0.0
    %320 = vmatprep.subr.mxu0 0.0
    %321 = vmatpush1.msra.mxu0 0.0
    %322 = vmatprep.subr.mxu0 0.0
    %323 = vmatpush1.msra.mxu0 0.0
    %324 = vmatprep.subr.mxu0 0.0
    %325 = vmatpush1.msra.mxu0 0.0
    %326 = vmatprep.subr.mxu0 0.0
    %327 = vmatpush1.msra.mxu0 0.0
    %328 = vmatprep.subr.mxu0 0.0
    %329 = vmatpush1.msra.mxu0 0.0
    %330 = vmatprep.subr.mxu0 0.0
    %331 = vmatpush1.msra.mxu0 0.0
    %332 = vmatprep.subr.mxu0 0.0
    %333 = vmatpush1.msra.mxu0 0.0
    %334 = vmatprep.subr.mxu0 0.0
    %335 = vmatpush1.msra.mxu0 0.0
    %336 = vmatprep.subr.mxu0 0.0
    %337 = vmatpush1.msra.mxu0 0.0
    %338 = vmatprep.subr.mxu0 0.0
    %339 = vmatpush1.msra.mxu0 0.0
    %340 = vmatprep.subr.mxu0 0.0
    %341 = vmatpush1.msra.mxu0 0.0
    %342 = vmatprep.subr.mxu0 0.0
    %343 = vmatpush1.msra.mxu0 0.0
    %344 = vmatprep.subr.mxu0 0.0
    %345 = vmatpush1.msra.mxu0 0.0
    %346 = vmatprep.subr.mxu0 0.0
    %347 = vmatpush1.msra.mxu0 0.0
    %348 = vmatprep.subr.mxu0 0.0
    %349 = vmatpush1.msra.mxu0 0.0
    %350 = vmatprep.subr.mxu0 0.0
    %351 = vmatpush1.msra.mxu0 0.0
    %352 = vmatprep.subr.mxu0 0.0
    %353 = vmatpush1.msra.mxu0 0.0
    %354 = vmatprep.subr.mxu0 0.0
    %355 = vmatpush1.msra.mxu0 0.0
    %356 = vmatprep.subr.mxu0 0.0
    %357 = vmatpush1.msra.mxu0 0.0
    %358 = vmatprep.subr.mxu0 0.0
    %359 = vmatpush1.msra.mxu0 0.0
    %360 = vmatprep.subr.mxu0 0.0
    %361 = vmatpush1.msra.mxu0 0.0
    %362 = vmatprep.subr.mxu0 0.0
    %363 = vmatpush1.msra.mxu0 0.0
    %364 = vmatprep.subr.mxu0 0.0
    %365 = vmatpush1.msra.mxu0 0.0
    %366 = vmatprep.subr.mxu0 0.0
    %367 = vmatpush1.msra.mxu0 0.0
    %368 = vmatprep.subr.mxu0 0.0
    %369 = vmatpush1.msra.mxu0 0.0
    %370 = vmatprep.subr.mxu0 0.0
    %371 = vmatpush1.msra.mxu0 0.0
    %372 = vmatprep.mubr.f32.mxu0 0.0
    %373 = vmatmul.mubr.f32.gmra.mrb[0].mxu0 %v306
    %v374 = vpop.f32.mrb[0].mxu0
    %v375 = vadd.f32 0.0, %v374
    %v376 = vpop.f32.mrb[0].mxu0
    %377 = vdwg.mxu0
    %v378 = vadd.f32 %v304, %v375
    %v379 = vtanh.pop %v378
    %s380 = scalar_lea.vmem [#allocation4], 16
    %381 = vst.msk [vmem:[%s380] sm:$0xff] %vm79, %v379
    %s382 = scalar_lea.vmem [#allocation3], 24
    %v383 = vld [vmem:[%s382] sm:$0xff]
    %v385 = vsel %vm79, %v379, 0
    %387 = vmatprep.subr.mxu0 0.0
    %388 = vmatpush1.msra.mxu0 %v217
    %389 = vmatprep.subr.mxu0 0.0
    %390 = vmatpush1.msra.mxu0 %v218
    %391 = vmatprep.subr.mxu0 0.0
    %392 = vmatpush1.msra.mxu0 %v219
    %393 = vmatprep.subr.mxu0 0.0
    %394 = vmatpush1.msra.mxu0 %v220
    %395 = vmatprep.subr.mxu0 0.0
    %396 = vmatpush1.msra.mxu0 0.0
    %397 = vmatprep.subr.mxu0 0.0
    %398 = vmatpush1.msra.mxu0 0.0
    %399 = vmatprep.subr.mxu0 0.0
    %400 = vmatpush1.msra.mxu0 0.0
    %401 = vmatprep.subr.mxu0 0.0
    %402 = vmatpush1.msra.mxu0 0.0
    %403 = vmatprep.subr.mxu0 0.0
    %404 = vmatpush1.msra.mxu0 0.0
    %405 = vmatprep.subr.mxu0 0.0
    %406 = vmatpush1.msra.mxu0 0.0
    %407 = vmatprep.subr.mxu0 0.0
    %408 = vmatpush1.msra.mxu0 0.0
    %409 = vmatprep.subr.mxu0 0.0
    %410 = vmatpush1.msra.mxu0 0.0
    %411 = vmatprep.subr.mxu0 0.0
    %412 = vmatpush1.msra.mxu0 0.0
    %413 = vmatprep.subr.mxu0 0.0
    %414 = vmatpush1.msra.mxu0 0.0
    %415 = vmatprep.subr.mxu0 0.0
    %416 = vmatpush1.msra.mxu0 0.0
    %417 = vmatprep.subr.mxu0 0.0
    %418 = vmatpush1.msra.mxu0 0.0
    %419 = vmatprep.subr.mxu0 0.0
    %420 = vmatpush1.msra.mxu0 0.0
    %421 = vmatprep.subr.mxu0 0.0
    %422 = vmatpush1.msra.mxu0 0.0
    %423 = vmatprep.subr.mxu0 0.0
    %424 = vmatpush1.msra.mxu0 0.0
    %425 = vmatprep.subr.mxu0 0.0
    %426 = vmatpush1.msra.mxu0 0.0
    %427 = vmatprep.subr.mxu0 0.0
    %428 = vmatpush1.msra.mxu0 0.0
    %429 = vmatprep.subr.mxu0 0.0
    %430 = vmatpush1.msra.mxu0 0.0
    %431 = vmatprep.subr.mxu0 0.0
    %432 = vmatpush1.msra.mxu0 0.0
    %433 = vmatprep.subr.mxu0 0.0
    %434 = vmatpush1.msra.mxu0 0.0
    %435 = vmatprep.subr.mxu0 0.0
    %436 = vmatpush1.msra.mxu0 0.0
    %437 = vmatprep.subr.mxu0 0.0
    %438 = vmatpush1.msra.mxu0 0.0
    %439 = vmatprep.subr.mxu0 0.0
    %440 = vmatpush1.msra.mxu0 0.0
    %441 = vmatprep.subr.mxu0 0.0
    %442 = vmatpush1.msra.mxu0 0.0
    %443 = vmatprep.subr.mxu0 0.0
    %444 = vmatpush1.msra.mxu0 0.0
    %445 = vmatprep.subr.mxu0 0.0
    %446 = vmatpush1.msra.mxu0 0.0
    %447 = vmatprep.subr.mxu0 0.0
    %448 = vmatpush1.msra.mxu0 0.0
    %449 = vmatprep.subr.mxu0 0.0
    %450 = vmatpush1.msra.mxu0 0.0
    %451 = vmatprep.mubr.f32.mxu0 0.0
    %452 = vmatmul.mubr.f32.gmra.mrb[0].mxu0 %v385
    %v453 = vpop.f32.mrb[0].mxu0
    %v454 = vadd.f32 0.0, %v453
    %v455 = vpop.f32.mrb[0].mxu0
    %456 = vdwg.mxu0
    %v457 = vadd.f32 %v383, %v454
    %v458 = vtanh.pop %v457
    %s459 = scalar_lea.vmem [#allocation4], 24
    %460 = vst.msk [vmem:[%s459] sm:$0xff] %vm79, %v458
    %s461 = scalar_lea.vmem [#allocation3], 32
    %v462 = vld [vmem:[%s461] sm:$0xff]
    %v464 = vsel %vm79, %v458, 0
    %466 = vmatprep.subr.mxu0 0.0
    %467 = vmatpush1.msra.mxu0 %v217
    %468 = vmatprep.subr.mxu0 0.0
    %469 = vmatpush1.msra.mxu0 %v218
    %470 = vmatprep.subr.mxu0 0.0
    %471 = vmatpush1.msra.mxu0 %v219
    %472 = vmatprep.subr.mxu0 0.0
    %473 = vmatpush1.msra.mxu0 %v220
    %474 = vmatprep.subr.mxu0 0.0
    %475 = vmatpush1.msra.mxu0 0.0
    %476 = vmatprep.subr.mxu0 0.0
    %477 = vmatpush1.msra.mxu0 0.0
    %478 = vmatprep.subr.mxu0 0.0
    %479 = vmatpush1.msra.mxu0 0.0
    %480 = vmatprep.subr.mxu0 0.0
    %481 = vmatpush1.msra.mxu0 0.0
    %482 = vmatprep.subr.mxu0 0.0
    %483 = vmatpush1.msra.mxu0 0.0
    %484 = vmatprep.subr.mxu0 0.0
    %485 = vmatpush1.msra.mxu0 0.0
    %486 = vmatprep.subr.mxu0 0.0
    %487 = vmatpush1.msra.mxu0 0.0
    %488 = vmatprep.subr.mxu0 0.0
    %489 = vmatpush1.msra.mxu0 0.0
    %490 = vmatprep.subr.mxu0 0.0
    %491 = vmatpush1.msra.mxu0 0.0
    %492 = vmatprep.subr.mxu0 0.0
    %493 = vmatpush1.msra.mxu0 0.0
    %494 = vmatprep.subr.mxu0 0.0
    %495 = vmatpush1.msra.mxu0 0.0
    %496 = vmatprep.subr.mxu0 0.0
    %497 = vmatpush1.msra.mxu0 0.0
    %498 = vmatprep.subr.mxu0 0.0
    %499 = vmatpush1.msra.mxu0 0.0
    %500 = vmatprep.subr.mxu0 0.0
    %501 = vmatpush1.msra.mxu0 0.0
    %502 = vmatprep.subr.mxu0 0.0
    %503 = vmatpush1.msra.mxu0 0.0
    %504 = vmatprep.subr.mxu0 0.0
    %505 = vmatpush1.msra.mxu0 0.0
    %506 = vmatprep.subr.mxu0 0.0
    %507 = vmatpush1.msra.mxu0 0.0
    %508 = vmatprep.subr.mxu0 0.0
    %509 = vmatpush1.msra.mxu0 0.0
    %510 = vmatprep.subr.mxu0 0.0
    %511 = vmatpush1.msra.mxu0 0.0
    %512 = vmatprep.subr.mxu0 0.0
    %513 = vmatpush1.msra.mxu0 0.0
    %514 = vmatprep.subr.mxu0 0.0
    %515 = vmatpush1.msra.mxu0 0.0
    %516 = vmatprep.subr.mxu0 0.0
    %517 = vmatpush1.msra.mxu0 0.0
    %518 = vmatprep.subr.mxu0 0.0
    %519 = vmatpush1.msra.mxu0 0.0
    %520 = vmatprep.subr.mxu0 0.0
    %521 = vmatpush1.msra.mxu0 0.0
    %522 = vmatprep.subr.mxu0 0.0
    %523 = vmatpush1.msra.mxu0 0.0
    %524 = vmatprep.subr.mxu0 0.0
    %525 = vmatpush1.msra.mxu0 0.0
    %526 = vmatprep.subr.mxu0 0.0
    %527 = vmatpush1.msra.mxu0 0.0
    %528 = vmatprep.subr.mxu0 0.0
    %529 = vmatpush1.msra.mxu0 0.0
    %530 = vmatprep.mubr.f32.mxu0 0.0
    %531 = vmatmul.mubr.f32.gmra.mrb[0].mxu0 %v464
    %v532 = vpop.f32.mrb[0].mxu0
    %v533 = vadd.f32 0.0, %v532
    %v534 = vpop.f32.mrb[0].mxu0
    %535 = vdwg.mxu0
    %v536 = vadd.f32 %v462, %v533
    %v537 = vtanh.pop %v536
    %s538 = scalar_lea.vmem [#allocation4], 32
    %539 = vst.msk [vmem:[%s538] sm:$0xff] %vm79, %v537
    %s540 = scalar_lea.vmem [#allocation3], 40
    %v541 = vld [vmem:[%s540] sm:$0xff]
    %v543 = vsel %vm79, %v537, 0
    %545 = vmatprep.subr.mxu0 0.0
    %546 = vmatpush1.msra.mxu0 %v217
    %547 = vmatprep.subr.mxu0 0.0
    %548 = vmatpush1.msra.mxu0 %v218
    %549 = vmatprep.subr.mxu0 0.0
    %550 = vmatpush1.msra.mxu0 %v219
    %551 = vmatprep.subr.mxu0 0.0
    %552 = vmatpush1.msra.mxu0 %v220
    %553 = vmatprep.subr.mxu0 0.0
    %554 = vmatpush1.msra.mxu0 0.0
    %555 = vmatprep.subr.mxu0 0.0
    %556 = vmatpush1.msra.mxu0 0.0
    %557 = vmatprep.subr.mxu0 0.0
    %558 = vmatpush1.msra.mxu0 0.0
    %559 = vmatprep.subr.mxu0 0.0
    %560 = vmatpush1.msra.mxu0 0.0
    %561 = vmatprep.subr.mxu0 0.0
    %562 = vmatpush1.msra.mxu0 0.0
    %563 = vmatprep.subr.mxu0 0.0
    %564 = vmatpush1.msra.mxu0 0.0
    %565 = vmatprep.subr.mxu0 0.0
    %566 = vmatpush1.msra.mxu0 0.0
    %567 = vmatprep.subr.mxu0 0.0
    %568 = vmatpush1.msra.mxu0 0.0
    %569 = vmatprep.subr.mxu0 0.0
    %570 = vmatpush1.msra.mxu0 0.0
    %571 = vmatprep.subr.mxu0 0.0
    %572 = vmatpush1.msra.mxu0 0.0
    %573 = vmatprep.subr.mxu0 0.0
    %574 = vmatpush1.msra.mxu0 0.0
    %575 = vmatprep.subr.mxu0 0.0
    %576 = vmatpush1.msra.mxu0 0.0
    %577 = vmatprep.subr.mxu0 0.0
    %578 = vmatpush1.msra.mxu0 0.0
    %579 = vmatprep.subr.mxu0 0.0
    %580 = vmatpush1.msra.mxu0 0.0
    %581 = vmatprep.subr.mxu0 0.0
    %582 = vmatpush1.msra.mxu0 0.0
    %583 = vmatprep.subr.mxu0 0.0
    %584 = vmatpush1.msra.mxu0 0.0
    %585 = vmatprep.subr.mxu0 0.0
    %586 = vmatpush1.msra.mxu0 0.0
    %587 = vmatprep.subr.mxu0 0.0
    %588 = vmatpush1.msra.mxu0 0.0
    %589 = vmatprep.subr.mxu0 0.0
    %590 = vmatpush1.msra.mxu0 0.0
    %591 = vmatprep.subr.mxu0 0.0
    %592 = vmatpush1.msra.mxu0 0.0
    %593 = vmatprep.subr.mxu0 0.0
    %594 = vmatpush1.msra.mxu0 0.0
    %595 = vmatprep.subr.mxu0 0.0
    %596 = vmatpush1.msra.mxu0 0.0
    %597 = vmatprep.subr.mxu0 0.0
    %598 = vmatpush1.msra.mxu0 0.0
    %599 = vmatprep.subr.mxu0 0.0
    %600 = vmatpush1.msra.mxu0 0.0
    %601 = vmatprep.subr.mxu0 0.0
    %602 = vmatpush1.msra.mxu0 0.0
    %603 = vmatprep.subr.mxu0 0.0
    %604 = vmatpush1.msra.mxu0 0.0
    %605 = vmatprep.subr.mxu0 0.0
    %606 = vmatpush1.msra.mxu0 0.0
    %607 = vmatprep.subr.mxu0 0.0
    %608 = vmatpush1.msra.mxu0 0.0
    %609 = vmatprep.mubr.f32.mxu0 0.0
    %610 = vmatmul.mubr.f32.gmra.mrb[0].mxu0 %v543
    %v611 = vpop.f32.mrb[0].mxu0
    %v612 = vadd.f32 0.0, %v611
    %v613 = vpop.f32.mrb[0].mxu0
    %614 = vdwg.mxu0
    %v615 = vadd.f32 %v541, %v612
    %v616 = vtanh.pop %v615
    %s617 = scalar_lea.vmem [#allocation4], 40
    %618 = vst.msk [vmem:[%s617] sm:$0xff] %vm79, %v616
    %s619 = scalar_lea.vmem [#allocation3], 48
    %v620 = vld [vmem:[%s619] sm:$0xff]
    %v622 = vsel %vm79, %v616, 0
    %624 = vmatprep.subr.mxu0 0.0
    %625 = vmatpush1.msra.mxu0 %v217
    %626 = vmatprep.subr.mxu0 0.0
    %627 = vmatpush1.msra.mxu0 %v218
    %628 = vmatprep.subr.mxu0 0.0
    %629 = vmatpush1.msra.mxu0 %v219
    %630 = vmatprep.subr.mxu0 0.0
    %631 = vmatpush1.msra.mxu0 %v220
    %632 = vmatprep.subr.mxu0 0.0
    %633 = vmatpush1.msra.mxu0 0.0
    %634 = vmatprep.subr.mxu0 0.0
    %635 = vmatpush1.msra.mxu0 0.0
    %636 = vmatprep.subr.mxu0 0.0
    %637 = vmatpush1.msra.mxu0 0.0
    %638 = vmatprep.subr.mxu0 0.0
    %639 = vmatpush1.msra.mxu0 0.0
    %640 = vmatprep.subr.mxu0 0.0
    %641 = vmatpush1.msra.mxu0 0.0
    %642 = vmatprep.subr.mxu0 0.0
    %643 = vmatpush1.msra.mxu0 0.0
    %644 = vmatprep.subr.mxu0 0.0
    %645 = vmatpush1.msra.mxu0 0.0
    %646 = vmatprep.subr.mxu0 0.0
    %647 = vmatpush1.msra.mxu0 0.0
    %648 = vmatprep.subr.mxu0 0.0
    %649 = vmatpush1.msra.mxu0 0.0
    %650 = vmatprep.subr.mxu0 0.0
    %651 = vmatpush1.msra.mxu0 0.0
    %652 = vmatprep.subr.mxu0 0.0
    %653 = vmatpush1.msra.mxu0 0.0
    %654 = vmatprep.subr.mxu0 0.0
    %655 = vmatpush1.msra.mxu0 0.0
    %656 = vmatprep.subr.mxu0 0.0
    %657 = vmatpush1.msra.mxu0 0.0
    %658 = vmatprep.subr.mxu0 0.0
    %659 = vmatpush1.msra.mxu0 0.0
    %660 = vmatprep.subr.mxu0 0.0
    %661 = vmatpush1.msra.mxu0 0.0
    %662 = vmatprep.subr.mxu0 0.0
    %663 = vmatpush1.msra.mxu0 0.0
    %664 = vmatprep.subr.mxu0 0.0
    %665 = vmatpush1.msra.mxu0 0.0
    %666 = vmatprep.subr.mxu0 0.0
    %667 = vmatpush1.msra.mxu0 0.0
    %668 = vmatprep.subr.mxu0 0.0
    %669 = vmatpush1.msra.mxu0 0.0
    %670 = vmatprep.subr.mxu0 0.0
    %671 = vmatpush1.msra.mxu0 0.0
    %672 = vmatprep.subr.mxu0 0.0
    %673 = vmatpush1.msra.mxu0 0.0
    %674 = vmatprep.subr.mxu0 0.0
    %675 = vmatpush1.msra.mxu0 0.0
    %676 = vmatprep.subr.mxu0 0.0
    %677 = vmatpush1.msra.mxu0 0.0
    %678 = vmatprep.subr.mxu0 0.0
    %679 = vmatpush1.msra.mxu0 0.0
    %680 = vmatprep.subr.mxu0 0.0
    %681 = vmatpush1.msra.mxu0 0.0
    %682 = vmatprep.subr.mxu0 0.0
    %683 = vmatpush1.msra.mxu0 0.0
    %684 = vmatprep.subr.mxu0 0.0
    %685 = vmatpush1.msra.mxu0 0.0
    %686 = vmatprep.subr.mxu0 0.0
    %687 = vmatpush1.msra.mxu0 0.0
    %688 = vmatprep.mubr.f32.mxu0 0.0
    %689 = vmatmul.mubr.f32.gmra.mrb[0].mxu0 %v622
    %v690 = vpop.f32.mrb[0].mxu0
    %v691 = vadd.f32 0.0, %v690
    %v692 = vpop.f32.mrb[0].mxu0
    %693 = vdwg.mxu0
    %v694 = vadd.f32 %v620, %v691
    %v695 = vtanh.pop %v694
    %s696 = scalar_lea.vmem [#allocation4], 48
    %697 = vst.msk [vmem:[%s696] sm:$0xff] %vm79, %v695
    %s698 = scalar_lea.vmem [#allocation3], 56
    %v699 = vld [vmem:[%s698] sm:$0xff]
    %v701 = vsel %vm79, %v695, 0
    %703 = vmatprep.subr.mxu0 0.0
    %704 = vmatpush1.msra.mxu0 %v217
    %705 = vmatprep.subr.mxu0 0.0
    %706 = vmatpush1.msra.mxu0 %v218
    %707 = vmatprep.subr.mxu0 0.0
    %708 = vmatpush1.msra.mxu0 %v219
    %709 = vmatprep.subr.mxu0 0.0
    %710 = vmatpush1.msra.mxu0 %v220
    %711 = vmatprep.subr.mxu0 0.0
    %712 = vmatpush1.msra.mxu0 0.0
    %713 = vmatprep.subr.mxu0 0.0
    %714 = vmatpush1.msra.mxu0 0.0
    %715 = vmatprep.subr.mxu0 0.0
    %716 = vmatpush1.msra.mxu0 0.0
    %717 = vmatprep.subr.mxu0 0.0
    %718 = vmatpush1.msra.mxu0 0.0
    %719 = vmatprep.subr.mxu0 0.0
    %720 = vmatpush1.msra.mxu0 0.0
    %721 = vmatprep.subr.mxu0 0.0
    %722 = vmatpush1.msra.mxu0 0.0
    %723 = vmatprep.subr.mxu0 0.0
    %724 = vmatpush1.msra.mxu0 0.0
    %725 = vmatprep.subr.mxu0 0.0
    %726 = vmatpush1.msra.mxu0 0.0
    %727 = vmatprep.subr.mxu0 0.0
    %728 = vmatpush1.msra.mxu0 0.0
    %729 = vmatprep.subr.mxu0 0.0
    %730 = vmatpush1.msra.mxu0 0.0
    %731 = vmatprep.subr.mxu0 0.0
    %732 = vmatpush1.msra.mxu0 0.0
    %733 = vmatprep.subr.mxu0 0.0
    %734 = vmatpush1.msra.mxu0 0.0
    %735 = vmatprep.subr.mxu0 0.0
    %736 = vmatpush1.msra.mxu0 0.0
    %737 = vmatprep.subr.mxu0 0.0
    %738 = vmatpush1.msra.mxu0 0.0
    %739 = vmatprep.subr.mxu0 0.0
    %740 = vmatpush1.msra.mxu0 0.0
    %741 = vmatprep.subr.mxu0 0.0
    %742 = vmatpush1.msra.mxu0 0.0
    %743 = vmatprep.subr.mxu0 0.0
    %744 = vmatpush1.msra.mxu0 0.0
    %745 = vmatprep.subr.mxu0 0.0
    %746 = vmatpush1.msra.mxu0 0.0
    %747 = vmatprep.subr.mxu0 0.0
    %748 = vmatpush1.msra.mxu0 0.0
    %749 = vmatprep.subr.mxu0 0.0
    %750 = vmatpush1.msra.mxu0 0.0
    %751 = vmatprep.subr.mxu0 0.0
    %752 = vmatpush1.msra.mxu0 0.0
    %753 = vmatprep.subr.mxu0 0.0
    %754 = vmatpush1.msra.mxu0 0.0
    %755 = vmatprep.subr.mxu0 0.0
    %756 = vmatpush1.msra.mxu0 0.0
    %757 = vmatprep.subr.mxu0 0.0
    %758 = vmatpush1.msra.mxu0 0.0
    %759 = vmatprep.subr.mxu0 0.0
    %760 = vmatpush1.msra.mxu0 0.0
    %761 = vmatprep.subr.mxu0 0.0
    %762 = vmatpush1.msra.mxu0 0.0
    %763 = vmatprep.subr.mxu0 0.0
    %764 = vmatpush1.msra.mxu0 0.0
    %765 = vmatprep.subr.mxu0 0.0
    %766 = vmatpush1.msra.mxu0 0.0
    %767 = vmatprep.mubr.f32.mxu0 0.0
    %768 = vmatmul.mubr.f32.gmra.mrb[0].mxu0 %v701
    %v769 = vpop.f32.mrb[0].mxu0
    %v770 = vadd.f32 0.0, %v769
    %v771 = vpop.f32.mrb[0].mxu0
    %772 = vdwg.mxu0
    %v773 = vadd.f32 %v699, %v770
    %v774 = vtanh.pop %v773
    %s775 = scalar_lea.vmem [#allocation4], 56
    %776 = vst.msk [vmem:[%s775] sm:$0xff] %vm79, %v774
    %v777 = vld [vmem:[#allocation4] sm:$0xff]
    %v778 = vld [vmem:[#allocation4 + $0x8] sm:$0xff]
    %v779 = vld [vmem:[#allocation4 + $0x10] sm:$0xff]
    %v780 = vld [vmem:[#allocation4 + $0x18] sm:$0xff]
    %v781 = vld [vmem:[#allocation4 + $0x20] sm:$0xff]
    %v782 = vld [vmem:[#allocation4 + $0x28] sm:$0xff]
    %v783 = vld [vmem:[#allocation4 + $0x30] sm:$0xff]
    %v784 = vld [vmem:[#allocation4 + $0x38] sm:$0xff]
    %v785 = vld [vmem:[%s5] sm:$0xff]
    %v786 = vld [vmem:[%s5 + $0x8] sm:$0xff]
    %v787 = vld [vmem:[%s5 + $0x10] sm:$0xff]
    %v788 = vld [vmem:[%s5 + $0x18] sm:$0xff]
    %v789 = vld [vmem:[%s7] sm:$0x1]
    %v791 = vlaneseq
    %v792 = vshrl.u32 %v791, 7
    %v793 = vsub.s32 0, %v792
    %v794 = vrot.slane %v789, %v793
    %v797 = vsel %vm79, %v777, 0
    %v800 = vsel %vm79, %v778, 0
    %v803 = vsel %vm79, %v779, 0
    %v806 = vsel %vm79, %v780, 0
    %v809 = vsel %vm79, %v781, 0
    %v812 = vsel %vm79, %v782, 0
    %v815 = vsel %vm79, %v783, 0
    %v818 = vsel %vm79, %v784, 0
    %820 = vmatprep.subr.mxu0 0.0
    %821 = vmatpush1.msra.mxu0 %v785
    %822 = vmatprep.subr.mxu0 0.0
    %823 = vmatpush1.msra.mxu0 %v786
    %824 = vmatprep.subr.mxu0 0.0
    %825 = vmatpush1.msra.mxu0 %v787
    %826 = vmatprep.subr.mxu0 0.0
    %827 = vmatpush1.msra.mxu0 %v788
    %828 = vmatprep.subr.mxu0 0.0
    %829 = vmatpush1.msra.mxu0 0.0
    %830 = vmatprep.subr.mxu0 0.0
    %831 = vmatpush1.msra.mxu0 0.0
    %832 = vmatprep.subr.mxu0 0.0
    %833 = vmatpush1.msra.mxu0 0.0
    %834 = vmatprep.subr.mxu0 0.0
    %835 = vmatpush1.msra.mxu0 0.0
    %836 = vmatprep.subr.mxu0 0.0
    %837 = vmatpush1.msra.mxu0 0.0
    %838 = vmatprep.subr.mxu0 0.0
    %839 = vmatpush1.msra.mxu0 0.0
    %840 = vmatprep.subr.mxu0 0.0
    %841 = vmatpush1.msra.mxu0 0.0
    %842 = vmatprep.subr.mxu0 0.0
    %843 = vmatpush1.msra.mxu0 0.0
    %844 = vmatprep.subr.mxu0 0.0
    %845 = vmatpush1.msra.mxu0 0.0
    %846 = vmatprep.subr.mxu0 0.0
    %847 = vmatpush1.msra.mxu0 0.0
    %848 = vmatprep.subr.mxu0 0.0
    %849 = vmatpush1.msra.mxu0 0.0
    %850 = vmatprep.subr.mxu0 0.0
    %851 = vmatpush1.msra.mxu0 0.0
    %852 = vmatprep.subr.mxu0 0.0
    %853 = vmatpush1.msra.mxu0 0.0
    %854 = vmatprep.subr.mxu0 0.0
    %855 = vmatpush1.msra.mxu0 0.0
    %856 = vmatprep.subr.mxu0 0.0
    %857 = vmatpush1.msra.mxu0 0.0
    %858 = vmatprep.subr.mxu0 0.0
    %859 = vmatpush1.msra.mxu0 0.0
    %860 = vmatprep.subr.mxu0 0.0
    %861 = vmatpush1.msra.mxu0 0.0
    %862 = vmatprep.subr.mxu0 0.0
    %863 = vmatpush1.msra.mxu0 0.0
    %864 = vmatprep.subr.mxu0 0.0
    %865 = vmatpush1.msra.mxu0 0.0
    %866 = vmatprep.subr.mxu0 0.0
    %867 = vmatpush1.msra.mxu0 0.0
    %868 = vmatprep.subr.mxu0 0.0
    %869 = vmatpush1.msra.mxu0 0.0
    %870 = vmatprep.subr.mxu0 0.0
    %871 = vmatpush1.msra.mxu0 0.0
    %872 = vmatprep.subr.mxu0 0.0
    %873 = vmatpush1.msra.mxu0 0.0
    %874 = vmatprep.subr.mxu0 0.0
    %875 = vmatpush1.msra.mxu0 0.0
    %876 = vmatprep.subr.mxu0 0.0
    %877 = vmatpush1.msra.mxu0 0.0
    %878 = vmatprep.subr.mxu0 0.0
    %879 = vmatpush1.msra.mxu0 0.0
    %880 = vmatprep.subr.mxu0 0.0
    %881 = vmatpush1.msra.mxu0 0.0
    %882 = vmatprep.subr.mxu0 0.0
    %883 = vmatpush1.msra.mxu0 0.0
    %884 = vmatprep.mubr.f32.mxu0 0.0
    %885 = vmatmul.mubr.f32.gmra.mrb[0].mxu0 %v797
    %v886 = vpop.f32.mrb[0].mxu0
    %v887 = vadd.f32 %v794, %v886
    %v888 = vpop.f32.mrb[0].mxu0
    %889 = vmatprep.mubr.f32.mxu0 0.0
    %890 = vmatmul.mubr.f32.gmra.mrb[0].mxu0 %v800
    %v891 = vpop.f32.mrb[0].mxu0
    %v892 = vadd.f32 %v794, %v891
    %v893 = vpop.f32.mrb[0].mxu0
    %894 = vmatprep.mubr.f32.mxu0 0.0
    %895 = vmatmul.mubr.f32.gmra.mrb[0].mxu0 %v803
    %v896 = vpop.f32.mrb[0].mxu0
    %v897 = vadd.f32 %v794, %v896
    %v898 = vpop.f32.mrb[0].mxu0
    %899 = vmatprep.mubr.f32.mxu0 0.0
    %900 = vmatmul.mubr.f32.gmra.mrb[0].mxu0 %v806
    %v901 = vpop.f32.mrb[0].mxu0
    %v902 = vadd.f32 %v794, %v901
    %v903 = vpop.f32.mrb[0].mxu0
    %904 = vmatprep.mubr.f32.mxu0 0.0
    %905 = vmatmul.mubr.f32.gmra.mrb[0].mxu0 %v809
    %v906 = vpop.f32.mrb[0].mxu0
    %v907 = vadd.f32 %v794, %v906
    %v908 = vpop.f32.mrb[0].mxu0
    %909 = vmatprep.mubr.f32.mxu0 0.0
    %910 = vmatmul.mubr.f32.gmra.mrb[0].mxu0 %v812
    %v911 = vpop.f32.mrb[0].mxu0
    %v912 = vadd.f32 %v794, %v911
    %v913 = vpop.f32.mrb[0].mxu0
    %914 = vmatprep.mubr.f32.mxu0 0.0
    %915 = vmatmul.mubr.f32.gmra.mrb[0].mxu0 %v815
    %v916 = vpop.f32.mrb[0].mxu0
    %v917 = vadd.f32 %v794, %v916
    %v918 = vpop.f32.mrb[0].mxu0
    %919 = vmatprep.mubr.f32.mxu0 0.0
    %920 = vmatmul.mubr.f32.gmra.mrb[0].mxu0 %v818
    %v921 = vpop.f32.mrb[0].mxu0
    %v922 = vadd.f32 %v794, %v921
    %v923 = vpop.f32.mrb[0].mxu0
    %924 = vdwg.mxu0
    %925 = vst.msk [vmem:[#allocation3] sm:$0xff] %vm79, %v887
    %926 = vst.msk [vmem:[#allocation3 + $0x8] sm:$0xff] %vm79, %v892
    %927 = vst.msk [vmem:[#allocation3 + $0x10] sm:$0xff] %vm79, %v897
    %928 = vst.msk [vmem:[#allocation3 + $0x18] sm:$0xff] %vm79, %v902
    %929 = vst.msk [vmem:[#allocation3 + $0x20] sm:$0xff] %vm79, %v907
    %930 = vst.msk [vmem:[#allocation3 + $0x28] sm:$0xff] %vm79, %v912
    %931 = vst.msk [vmem:[#allocation3 + $0x30] sm:$0xff] %vm79, %v917
    %932 = vst.msk [vmem:[#allocation3 + $0x38] sm:$0xff] %vm79, %v922
    %v933 = vld [vmem:[%s6] sm:$0xff]
    %v934 = vld [vmem:[%s6 + $0x8] sm:$0xff]
    %v935 = vld [vmem:[%s6 + $0x10] sm:$0xff]
    %v936 = vld [vmem:[%s6 + $0x18] sm:$0xff]
    %v937 = vld [vmem:[#allocation3] sm:$0xff]
    %v938 = vtanh.pop %v937
    %v939 = vld [vmem:[%s224] sm:$0xff]
    %v941 = vsel %vm79, %v938, 0
    %943 = vmatprep.subr.mxu0 0.0
    %944 = vmatpush1.msra.mxu0 %v933
    %945 = vmatprep.subr.mxu0 0.0
    %946 = vmatpush1.msra.mxu0 %v934
    %947 = vmatprep.subr.mxu0 0.0
    %948 = vmatpush1.msra.mxu0 %v935
    %949 = vmatprep.subr.mxu0 0.0
    %950 = vmatpush1.msra.mxu0 %v936
    %951 = vmatprep.subr.mxu0 0.0
    %952 = vmatpush1.msra.mxu0 0.0
    %953 = vmatprep.subr.mxu0 0.0
    %954 = vmatpush1.msra.mxu0 0.0
    %955 = vmatprep.subr.mxu0 0.0
    %956 = vmatpush1.msra.mxu0 0.0
    %957 = vmatprep.subr.mxu0 0.0
    %958 = vmatpush1.msra.mxu0 0.0
    %959 = vmatprep.subr.mxu0 0.0
    %960 = vmatpush1.msra.mxu0 0.0
    %961 = vmatprep.subr.mxu0 0.0
    %962 = vmatpush1.msra.mxu0 0.0
    %963 = vmatprep.subr.mxu0 0.0
    %964 = vmatpush1.msra.mxu0 0.0
    %965 = vmatprep.subr.mxu0 0.0
    %966 = vmatpush1.msra.mxu0 0.0
    %967 = vmatprep.subr.mxu0 0.0
    %968 = vmatpush1.msra.mxu0 0.0
    %969 = vmatprep.subr.mxu0 0.0
    %970 = vmatpush1.msra.mxu0 0.0
    %971 = vmatprep.subr.mxu0 0.0
    %972 = vmatpush1.msra.mxu0 0.0
    %973 = vmatprep.subr.mxu0 0.0
    %974 = vmatpush1.msra.mxu0 0.0
    %975 = vmatprep.subr.mxu0 0.0
    %976 = vmatpush1.msra.mxu0 0.0
    %977 = vmatprep.subr.mxu0 0.0
    %978 = vmatpush1.msra.mxu0 0.0
    %979 = vmatprep.subr.mxu0 0.0
    %980 = vmatpush1.msra.mxu0 0.0
    %981 = vmatprep.subr.mxu0 0.0
    %982 = vmatpush1.msra.mxu0 0.0
    %983 = vmatprep.subr.mxu0 0.0
    %984 = vmatpush1.msra.mxu0 0.0
    %985 = vmatprep.subr.mxu0 0.0
    %986 = vmatpush1.msra.mxu0 0.0
    %987 = vmatprep.subr.mxu0 0.0
    %988 = vmatpush1.msra.mxu0 0.0
    %989 = vmatprep.subr.mxu0 0.0
    %990 = vmatpush1.msra.mxu0 0.0
    %991 = vmatprep.subr.mxu0 0.0
    %992 = vmatpush1.msra.mxu0 0.0
    %993 = vmatprep.subr.mxu0 0.0
    %994 = vmatpush1.msra.mxu0 0.0
    %995 = vmatprep.subr.mxu0 0.0
    %996 = vmatpush1.msra.mxu0 0.0
    %997 = vmatprep.subr.mxu0 0.0
    %998 = vmatpush1.msra.mxu0 0.0
    %999 = vmatprep.subr.mxu0 0.0
    %1000 = vmatpush1.msra.mxu0 0.0
    %1001 = vmatprep.subr.mxu0 0.0
    %1002 = vmatpush1.msra.mxu0 0.0
    %1003 = vmatprep.subr.mxu0 0.0
    %1004 = vmatpush1.msra.mxu0 0.0
    %1005 = vmatprep.subr.mxu0 0.0
    %1006 = vmatpush1.msra.mxu0 0.0
    %1007 = vmatprep.mubr.f32.mxu0 0.0
    %1008 = vmatmul.mubr.f32.gmra.mrb[0].mxu0 %v941
    %v1009 = vpop.f32.mrb[0].mxu0
    %v1010 = vadd.f32 0.0, %v1009
    %v1011 = vpop.f32.mrb[0].mxu0
    %1012 = vdwg.mxu0
    %v1013 = vadd.f32 %v939, %v1010
    %v1014 = vtanh.pop %v1013
    %v1015 = vld [vmem:[%s303] sm:$0xff]
    %v1017 = vsel %vm79, %v1014, 0
    %1019 = vmatprep.subr.mxu0 0.0
    %1020 = vmatpush1.msra.mxu0 %v933
    %1021 = vmatprep.subr.mxu0 0.0
    %1022 = vmatpush1.msra.mxu0 %v934
    %1023 = vmatprep.subr.mxu0 0.0
    %1024 = vmatpush1.msra.mxu0 %v935
    %1025 = vmatprep.subr.mxu0 0.0
    %1026 = vmatpush1.msra.mxu0 %v936
    %1027 = vmatprep.subr.mxu0 0.0
    %1028 = vmatpush1.msra.mxu0 0.0
    %1029 = vmatprep.subr.mxu0 0.0
    %1030 = vmatpush1.msra.mxu0 0.0
    %1031 = vmatprep.subr.mxu0 0.0
    %1032 = vmatpush1.msra.mxu0 0.0
    %1033 = vmatprep.subr.mxu0 0.0
    %1034 = vmatpush1.msra.mxu0 0.0
    %1035 = vmatprep.subr.mxu0 0.0
    %1036 = vmatpush1.msra.mxu0 0.0
    %1037 = vmatprep.subr.mxu0 0.0
    %1038 = vmatpush1.msra.mxu0 0.0
    %1039 = vmatprep.subr.mxu0 0.0
    %1040 = vmatpush1.msra.mxu0 0.0
    %1041 = vmatprep.subr.mxu0 0.0
    %1042 = vmatpush1.msra.mxu0 0.0
    %1043 = vmatprep.subr.mxu0 0.0
    %1044 = vmatpush1.msra.mxu0 0.0
    %1045 = vmatprep.subr.mxu0 0.0
    %1046 = vmatpush1.msra.mxu0 0.0
    %1047 = vmatprep.subr.mxu0 0.0
    %1048 = vmatpush1.msra.mxu0 0.0
    %1049 = vmatprep.subr.mxu0 0.0
    %1050 = vmatpush1.msra.mxu0 0.0
    %1051 = vmatprep.subr.mxu0 0.0
    %1052 = vmatpush1.msra.mxu0 0.0
    %1053 = vmatprep.subr.mxu0 0.0
    %1054 = vmatpush1.msra.mxu0 0.0
    %1055 = vmatprep.subr.mxu0 0.0
    %1056 = vmatpush1.msra.mxu0 0.0
    %1057 = vmatprep.subr.mxu0 0.0
    %1058 = vmatpush1.msra.mxu0 0.0
    %1059 = vmatprep.subr.mxu0 0.0
    %1060 = vmatpush1.msra.mxu0 0.0
    %1061 = vmatprep.subr.mxu0 0.0
    %1062 = vmatpush1.msra.mxu0 0.0
    %1063 = vmatprep.subr.mxu0 0.0
    %1064 = vmatpush1.msra.mxu0 0.0
    %1065 = vmatprep.subr.mxu0 0.0
    %1066 = vmatpush1.msra.mxu0 0.0
    %1067 = vmatprep.subr.mxu0 0.0
    %1068 = vmatpush1.msra.mxu0 0.0
    %1069 = vmatprep.subr.mxu0 0.0
    %1070 = vmatpush1.msra.mxu0 0.0
    %1071 = vmatprep.subr.mxu0 0.0
    %1072 = vmatpush1.msra.mxu0 0.0
    %1073 = vmatprep.subr.mxu0 0.0
    %1074 = vmatpush1.msra.mxu0 0.0
    %1075 = vmatprep.subr.mxu0 0.0
    %1076 = vmatpush1.msra.mxu0 0.0
    %1077 = vmatprep.subr.mxu0 0.0
    %1078 = vmatpush1.msra.mxu0 0.0
    %1079 = vmatprep.subr.mxu0 0.0
    %1080 = vmatpush1.msra.mxu0 0.0
    %1081 = vmatprep.subr.mxu0 0.0
    %1082 = vmatpush1.msra.mxu0 0.0
    %1083 = vmatprep.mubr.f32.mxu0 0.0
    %1084 = vmatmul.mubr.f32.gmra.mrb[0].mxu0 %v1017
    %v1085 = vpop.f32.mrb[0].mxu0
    %v1086 = vadd.f32 0.0, %v1085
    %v1087 = vpop.f32.mrb[0].mxu0
    %1088 = vdwg.mxu0
    %v1089 = vadd.f32 %v1015, %v1086
    %v1090 = vtanh.pop %v1089
    %v1091 = vld [vmem:[%s382] sm:$0xff]
    %v1093 = vsel %vm79, %v1090, 0
    %1095 = vmatprep.subr.mxu0 0.0
    %1096 = vmatpush1.msra.mxu0 %v933
    %1097 = vmatprep.subr.mxu0 0.0
    %1098 = vmatpush1.msra.mxu0 %v934
    %1099 = vmatprep.subr.mxu0 0.0
    %1100 = vmatpush1.msra.mxu0 %v935
    %1101 = vmatprep.subr.mxu0 0.0
    %1102 = vmatpush1.msra.mxu0 %v936
    %1103 = vmatprep.subr.mxu0 0.0
    %1104 = vmatpush1.msra.mxu0 0.0
    %1105 = vmatprep.subr.mxu0 0.0
    %1106 = vmatpush1.msra.mxu0 0.0
    %1107 = vmatprep.subr.mxu0 0.0
    %1108 = vmatpush1.msra.mxu0 0.0
    %1109 = vmatprep.subr.mxu0 0.0
    %1110 = vmatpush1.msra.mxu0 0.0
    %1111 = vmatprep.subr.mxu0 0.0
    %1112 = vmatpush1.msra.mxu0 0.0
    %1113 = vmatprep.subr.mxu0 0.0
    %1114 = vmatpush1.msra.mxu0 0.0
    %1115 = vmatprep.subr.mxu0 0.0
    %1116 = vmatpush1.msra.mxu0 0.0
    %1117 = vmatprep.subr.mxu0 0.0
    %1118 = vmatpush1.msra.mxu0 0.0
    %1119 = vmatprep.subr.mxu0 0.0
    %1120 = vmatpush1.msra.mxu0 0.0
    %1121 = vmatprep.subr.mxu0 0.0
    %1122 = vmatpush1.msra.mxu0 0.0
    %1123 = vmatprep.subr.mxu0 0.0
    %1124 = vmatpush1.msra.mxu0 0.0
    %1125 = vmatprep.subr.mxu0 0.0
    %1126 = vmatpush1.msra.mxu0 0.0
    %1127 = vmatprep.subr.mxu0 0.0
    %1128 = vmatpush1.msra.mxu0 0.0
    %1129 = vmatprep.subr.mxu0 0.0
    %1130 = vmatpush1.msra.mxu0 0.0
    %1131 = vmatprep.subr.mxu0 0.0
    %1132 = vmatpush1.msra.mxu0 0.0
    %1133 = vmatprep.subr.mxu0 0.0
    %1134 = vmatpush1.msra.mxu0 0.0
    %1135 = vmatprep.subr.mxu0 0.0
    %1136 = vmatpush1.msra.mxu0 0.0
    %1137 = vmatprep.subr.mxu0 0.0
    %1138 = vmatpush1.msra.mxu0 0.0
    %1139 = vmatprep.subr.mxu0 0.0
    %1140 = vmatpush1.msra.mxu0 0.0
    %1141 = vmatprep.subr.mxu0 0.0
    %1142 = vmatpush1.msra.mxu0 0.0
    %1143 = vmatprep.subr.mxu0 0.0
    %1144 = vmatpush1.msra.mxu0 0.0
    %1145 = vmatprep.subr.mxu0 0.0
    %1146 = vmatpush1.msra.mxu0 0.0
    %1147 = vmatprep.subr.mxu0 0.0
    %1148 = vmatpush1.msra.mxu0 0.0
    %1149 = vmatprep.subr.mxu0 0.0
    %1150 = vmatpush1.msra.mxu0 0.0
    %1151 = vmatprep.subr.mxu0 0.0
    %1152 = vmatpush1.msra.mxu0 0.0
    %1153 = vmatprep.subr.mxu0 0.0
    %1154 = vmatpush1.msra.mxu0 0.0
    %1155 = vmatprep.subr.mxu0 0.0
    %1156 = vmatpush1.msra.mxu0 0.0
    %1157 = vmatprep.subr.mxu0 0.0
    %1158 = vmatpush1.msra.mxu0 0.0
    %1159 = vmatprep.mubr.f32.mxu0 0.0
    %1160 = vmatmul.mubr.f32.gmra.mrb[0].mxu0 %v1093
    %v1161 = vpop.f32.mrb[0].mxu0
    %v1162 = vadd.f32 0.0, %v1161
    %v1163 = vpop.f32.mrb[0].mxu0
    %1164 = vdwg.mxu0
    %v1165 = vadd.f32 %v1091, %v1162
    %v1166 = vtanh.pop %v1165
    %v1167 = vld [vmem:[%s461] sm:$0xff]
    %v1169 = vsel %vm79, %v1166, 0
    %1171 = vmatprep.subr.mxu0 0.0
    %1172 = vmatpush1.msra.mxu0 %v933
    %1173 = vmatprep.subr.mxu0 0.0
    %1174 = vmatpush1.msra.mxu0 %v934
    %1175 = vmatprep.subr.mxu0 0.0
    %1176 = vmatpush1.msra.mxu0 %v935
    %1177 = vmatprep.subr.mxu0 0.0
    %1178 = vmatpush1.msra.mxu0 %v936
    %1179 = vmatprep.subr.mxu0 0.0
    %1180 = vmatpush1.msra.mxu0 0.0
    %1181 = vmatprep.subr.mxu0 0.0
    %1182 = vmatpush1.msra.mxu0 0.0
    %1183 = vmatprep.subr.mxu0 0.0
    %1184 = vmatpush1.msra.mxu0 0.0
    %1185 = vmatprep.subr.mxu0 0.0
    %1186 = vmatpush1.msra.mxu0 0.0
    %1187 = vmatprep.subr.mxu0 0.0
    %1188 = vmatpush1.msra.mxu0 0.0
    %1189 = vmatprep.subr.mxu0 0.0
    %1190 = vmatpush1.msra.mxu0 0.0
    %1191 = vmatprep.subr.mxu0 0.0
    %1192 = vmatpush1.msra.mxu0 0.0
    %1193 = vmatprep.subr.mxu0 0.0
    %1194 = vmatpush1.msra.mxu0 0.0
    %1195 = vmatprep.subr.mxu0 0.0
    %1196 = vmatpush1.msra.mxu0 0.0
    %1197 = vmatprep.subr.mxu0 0.0
    %1198 = vmatpush1.msra.mxu0 0.0
    %1199 = vmatprep.subr.mxu0 0.0
    %1200 = vmatpush1.msra.mxu0 0.0
    %1201 = vmatprep.subr.mxu0 0.0
    %1202 = vmatpush1.msra.mxu0 0.0
    %1203 = vmatprep.subr.mxu0 0.0
    %1204 = vmatpush1.msra.mxu0 0.0
    %1205 = vmatprep.subr.mxu0 0.0
    %1206 = vmatpush1.msra.mxu0 0.0
    %1207 = vmatprep.subr.mxu0 0.0
    %1208 = vmatpush1.msra.mxu0 0.0
    %1209 = vmatprep.subr.mxu0 0.0
    %1210 = vmatpush1.msra.mxu0 0.0
    %1211 = vmatprep.subr.mxu0 0.0
    %1212 = vmatpush1.msra.mxu0 0.0
    %1213 = vmatprep.subr.mxu0 0.0
    %1214 = vmatpush1.msra.mxu0 0.0
    %1215 = vmatprep.subr.mxu0 0.0
    %1216 = vmatpush1.msra.mxu0 0.0
    %1217 = vmatprep.subr.mxu0 0.0
    %1218 = vmatpush1.msra.mxu0 0.0
    %1219 = vmatprep.subr.mxu0 0.0
    %1220 = vmatpush1.msra.mxu0 0.0
    %1221 = vmatprep.subr.mxu0 0.0
    %1222 = vmatpush1.msra.mxu0 0.0
    %1223 = vmatprep.subr.mxu0 0.0
    %1224 = vmatpush1.msra.mxu0 0.0
    %1225 = vmatprep.subr.mxu0 0.0
    %1226 = vmatpush1.msra.mxu0 0.0
    %1227 = vmatprep.subr.mxu0 0.0
    %1228 = vmatpush1.msra.mxu0 0.0
    %1229 = vmatprep.subr.mxu0 0.0
    %1230 = vmatpush1.msra.mxu0 0.0
    %1231 = vmatprep.subr.mxu0 0.0
    %1232 = vmatpush1.msra.mxu0 0.0
    %1233 = vmatprep.subr.mxu0 0.0
    %1234 = vmatpush1.msra.mxu0 0.0
    %1235 = vmatprep.mubr.f32.mxu0 0.0
    %1236 = vmatmul.mubr.f32.gmra.mrb[0].mxu0 %v1169
    %v1237 = vpop.f32.mrb[0].mxu0
    %v1238 = vadd.f32 0.0, %v1237
    %v1239 = vpop.f32.mrb[0].mxu0
    %1240 = vdwg.mxu0
    %v1241 = vadd.f32 %v1167, %v1238
    %v1242 = vtanh.pop %v1241
    %v1243 = vld [vmem:[%s540] sm:$0xff]
    %v1245 = vsel %vm79, %v1242, 0
    %1247 = vmatprep.subr.mxu0 0.0
    %1248 = vmatpush1.msra.mxu0 %v933
    %1249 = vmatprep.subr.mxu0 0.0
    %1250 = vmatpush1.msra.mxu0 %v934
    %1251 = vmatprep.subr.mxu0 0.0
    %1252 = vmatpush1.msra.mxu0 %v935
    %1253 = vmatprep.subr.mxu0 0.0
    %1254 = vmatpush1.msra.mxu0 %v936
    %1255 = vmatprep.subr.mxu0 0.0
    %1256 = vmatpush1.msra.mxu0 0.0
    %1257 = vmatprep.subr.mxu0 0.0
    %1258 = vmatpush1.msra.mxu0 0.0
    %1259 = vmatprep.subr.mxu0 0.0
    %1260 = vmatpush1.msra.mxu0 0.0
    %1261 = vmatprep.subr.mxu0 0.0
    %1262 = vmatpush1.msra.mxu0 0.0
    %1263 = vmatprep.subr.mxu0 0.0
    %1264 = vmatpush1.msra.mxu0 0.0
    %1265 = vmatprep.subr.mxu0 0.0
    %1266 = vmatpush1.msra.mxu0 0.0
    %1267 = vmatprep.subr.mxu0 0.0
    %1268 = vmatpush1.msra.mxu0 0.0
    %1269 = vmatprep.subr.mxu0 0.0
    %1270 = vmatpush1.msra.mxu0 0.0
    %1271 = vmatprep.subr.mxu0 0.0
    %1272 = vmatpush1.msra.mxu0 0.0
    %1273 = vmatprep.subr.mxu0 0.0
    %1274 = vmatpush1.msra.mxu0 0.0
    %1275 = vmatprep.subr.mxu0 0.0
    %1276 = vmatpush1.msra.mxu0 0.0
    %1277 = vmatprep.subr.mxu0 0.0
    %1278 = vmatpush1.msra.mxu0 0.0
    %1279 = vmatprep.subr.mxu0 0.0
    %1280 = vmatpush1.msra.mxu0 0.0
    %1281 = vmatprep.subr.mxu0 0.0
    %1282 = vmatpush1.msra.mxu0 0.0
    %1283 = vmatprep.subr.mxu0 0.0
    %1284 = vmatpush1.msra.mxu0 0.0
    %1285 = vmatprep.subr.mxu0 0.0
    %1286 = vmatpush1.msra.mxu0 0.0
    %1287 = vmatprep.subr.mxu0 0.0
    %1288 = vmatpush1.msra.mxu0 0.0
    %1289 = vmatprep.subr.mxu0 0.0
    %1290 = vmatpush1.msra.mxu0 0.0
    %1291 = vmatprep.subr.mxu0 0.0
    %1292 = vmatpush1.msra.mxu0 0.0
    %1293 = vmatprep.subr.mxu0 0.0
    %1294 = vmatpush1.msra.mxu0 0.0
    %1295 = vmatprep.subr.mxu0 0.0
    %1296 = vmatpush1.msra.mxu0 0.0
    %1297 = vmatprep.subr.mxu0 0.0
    %1298 = vmatpush1.msra.mxu0 0.0
    %1299 = vmatprep.subr.mxu0 0.0
    %1300 = vmatpush1.msra.mxu0 0.0
    %1301 = vmatprep.subr.mxu0 0.0
    %1302 = vmatpush1.msra.mxu0 0.0
    %1303 = vmatprep.subr.mxu0 0.0
    %1304 = vmatpush1.msra.mxu0 0.0
    %1305 = vmatprep.subr.mxu0 0.0
    %1306 = vmatpush1.msra.mxu0 0.0
    %1307 = vmatprep.subr.mxu0 0.0
    %1308 = vmatpush1.msra.mxu0 0.0
    %1309 = vmatprep.subr.mxu0 0.0
    %1310 = vmatpush1.msra.mxu0 0.0
    %1311 = vmatprep.mubr.f32.mxu0 0.0
    %1312 = vmatmul.mubr.f32.gmra.mrb[0].mxu0 %v1245
    %v1313 = vpop.f32.mrb[0].mxu0
    %v1314 = vadd.f32 0.0, %v1313
    %v1315 = vpop.f32.mrb[0].mxu0
    %1316 = vdwg.mxu0
    %v1317 = vadd.f32 %v1243, %v1314
    %v1318 = vtanh.pop %v1317
    %v1319 = vld [vmem:[%s619] sm:$0xff]
    %v1321 = vsel %vm79, %v1318, 0
    %1323 = vmatprep.subr.mxu0 0.0
    %1324 = vmatpush1.msra.mxu0 %v933
    %1325 = vmatprep.subr.mxu0 0.0
    %1326 = vmatpush1.msra.mxu0 %v934
    %1327 = vmatprep.subr.mxu0 0.0
    %1328 = vmatpush1.msra.mxu0 %v935
    %1329 = vmatprep.subr.mxu0 0.0
    %1330 = vmatpush1.msra.mxu0 %v936
    %1331 = vmatprep.subr.mxu0 0.0
    %1332 = vmatpush1.msra.mxu0 0.0
    %1333 = vmatprep.subr.mxu0 0.0
    %1334 = vmatpush1.msra.mxu0 0.0
    %1335 = vmatprep.subr.mxu0 0.0
    %1336 = vmatpush1.msra.mxu0 0.0
    %1337 = vmatprep.subr.mxu0 0.0
    %1338 = vmatpush1.msra.mxu0 0.0
    %1339 = vmatprep.subr.mxu0 0.0
    %1340 = vmatpush1.msra.mxu0 0.0
    %1341 = vmatprep.subr.mxu0 0.0
    %1342 = vmatpush1.msra.mxu0 0.0
    %1343 = vmatprep.subr.mxu0 0.0
    %1344 = vmatpush1.msra.mxu0 0.0
    %1345 = vmatprep.subr.mxu0 0.0
    %1346 = vmatpush1.msra.mxu0 0.0
    %1347 = vmatprep.subr.mxu0 0.0
    %1348 = vmatpush1.msra.mxu0 0.0
    %1349 = vmatprep.subr.mxu0 0.0
    %1350 = vmatpush1.msra.mxu0 0.0
    %1351 = vmatprep.subr.mxu0 0.0
    %1352 = vmatpush1.msra.mxu0 0.0
    %1353 = vmatprep.subr.mxu0 0.0
    %1354 = vmatpush1.msra.mxu0 0.0
    %1355 = vmatprep.subr.mxu0 0.0
    %1356 = vmatpush1.msra.mxu0 0.0
    %1357 = vmatprep.subr.mxu0 0.0
    %1358 = vmatpush1.msra.mxu0 0.0
    %1359 = vmatprep.subr.mxu0 0.0
    %1360 = vmatpush1.msra.mxu0 0.0
    %1361 = vmatprep.subr.mxu0 0.0
    %1362 = vmatpush1.msra.mxu0 0.0
    %1363 = vmatprep.subr.mxu0 0.0
    %1364 = vmatpush1.msra.mxu0 0.0
    %1365 = vmatprep.subr.mxu0 0.0
    %1366 = vmatpush1.msra.mxu0 0.0
    %1367 = vmatprep.subr.mxu0 0.0
    %1368 = vmatpush1.msra.mxu0 0.0
    %1369 = vmatprep.subr.mxu0 0.0
    %1370 = vmatpush1.msra.mxu0 0.0
    %1371 = vmatprep.subr.mxu0 0.0
    %1372 = vmatpush1.msra.mxu0 0.0
    %1373 = vmatprep.subr.mxu0 0.0
    %1374 = vmatpush1.msra.mxu0 0.0
    %1375 = vmatprep.subr.mxu0 0.0
    %1376 = vmatpush1.msra.mxu0 0.0
    %1377 = vmatprep.subr.mxu0 0.0
    %1378 = vmatpush1.msra.mxu0 0.0
    %1379 = vmatprep.subr.mxu0 0.0
    %1380 = vmatpush1.msra.mxu0 0.0
    %1381 = vmatprep.subr.mxu0 0.0
    %1382 = vmatpush1.msra.mxu0 0.0
    %1383 = vmatprep.subr.mxu0 0.0
    %1384 = vmatpush1.msra.mxu0 0.0
    %1385 = vmatprep.subr.mxu0 0.0
    %1386 = vmatpush1.msra.mxu0 0.0
    %1387 = vmatprep.mubr.f32.mxu0 0.0
    %1388 = vmatmul.mubr.f32.gmra.mrb[0].mxu0 %v1321
    %v1389 = vpop.f32.mrb[0].mxu0
    %v1390 = vadd.f32 0.0, %v1389
    %v1391 = vpop.f32.mrb[0].mxu0
    %1392 = vdwg.mxu0
    %v1393 = vadd.f32 %v1319, %v1390
    %v1394 = vtanh.pop %v1393
    %v1395 = vld [vmem:[%s698] sm:$0xff]
    %v1397 = vsel %vm79, %v1394, 0
    %1399 = vmatprep.subr.mxu0 0.0
    %1400 = vmatpush1.msra.mxu0 %v933
    %1401 = vmatprep.subr.mxu0 0.0
    %1402 = vmatpush1.msra.mxu0 %v934
    %1403 = vmatprep.subr.mxu0 0.0
    %1404 = vmatpush1.msra.mxu0 %v935
    %1405 = vmatprep.subr.mxu0 0.0
    %1406 = vmatpush1.msra.mxu0 %v936
    %1407 = vmatprep.subr.mxu0 0.0
    %1408 = vmatpush1.msra.mxu0 0.0
    %1409 = vmatprep.subr.mxu0 0.0
    %1410 = vmatpush1.msra.mxu0 0.0
    %1411 = vmatprep.subr.mxu0 0.0
    %1412 = vmatpush1.msra.mxu0 0.0
    %1413 = vmatprep.subr.mxu0 0.0
    %1414 = vmatpush1.msra.mxu0 0.0
    %1415 = vmatprep.subr.mxu0 0.0
    %1416 = vmatpush1.msra.mxu0 0.0
    %1417 = vmatprep.subr.mxu0 0.0
    %1418 = vmatpush1.msra.mxu0 0.0
    %1419 = vmatprep.subr.mxu0 0.0
    %1420 = vmatpush1.msra.mxu0 0.0
    %1421 = vmatprep.subr.mxu0 0.0
    %1422 = vmatpush1.msra.mxu0 0.0
    %1423 = vmatprep.subr.mxu0 0.0
    %1424 = vmatpush1.msra.mxu0 0.0
    %1425 = vmatprep.subr.mxu0 0.0
    %1426 = vmatpush1.msra.mxu0 0.0
    %1427 = vmatprep.subr.mxu0 0.0
    %1428 = vmatpush1.msra.mxu0 0.0
    %1429 = vmatprep.subr.mxu0 0.0
    %1430 = vmatpush1.msra.mxu0 0.0
    %1431 = vmatprep.subr.mxu0 0.0
    %1432 = vmatpush1.msra.mxu0 0.0
    %1433 = vmatprep.subr.mxu0 0.0
    %1434 = vmatpush1.msra.mxu0 0.0
    %1435 = vmatprep.subr.mxu0 0.0
    %1436 = vmatpush1.msra.mxu0 0.0
    %1437 = vmatprep.subr.mxu0 0.0
    %1438 = vmatpush1.msra.mxu0 0.0
    %1439 = vmatprep.subr.mxu0 0.0
    %1440 = vmatpush1.msra.mxu0 0.0
    %1441 = vmatprep.subr.mxu0 0.0
    %1442 = vmatpush1.msra.mxu0 0.0
    %1443 = vmatprep.subr.mxu0 0.0
    %1444 = vmatpush1.msra.mxu0 0.0
    %1445 = vmatprep.subr.mxu0 0.0
    %1446 = vmatpush1.msra.mxu0 0.0
    %1447 = vmatprep.subr.mxu0 0.0
    %1448 = vmatpush1.msra.mxu0 0.0
    %1449 = vmatprep.subr.mxu0 0.0
    %1450 = vmatpush1.msra.mxu0 0.0
    %1451 = vmatprep.subr.mxu0 0.0
    %1452 = vmatpush1.msra.mxu0 0.0
    %1453 = vmatprep.subr.mxu0 0.0
    %1454 = vmatpush1.msra.mxu0 0.0
    %1455 = vmatprep.subr.mxu0 0.0
    %1456 = vmatpush1.msra.mxu0 0.0
    %1457 = vmatprep.subr.mxu0 0.0
    %1458 = vmatpush1.msra.mxu0 0.0
    %1459 = vmatprep.subr.mxu0 0.0
    %1460 = vmatpush1.msra.mxu0 0.0
    %1461 = vmatprep.subr.mxu0 0.0
    %1462 = vmatpush1.msra.mxu0 0.0
    %1463 = vmatprep.mubr.f32.mxu0 0.0
    %1464 = vmatmul.mubr.f32.gmra.mrb[0].mxu0 %v1397
    %v1465 = vpop.f32.mrb[0].mxu0
    %v1466 = vadd.f32 0.0, %v1465
    %v1467 = vpop.f32.mrb[0].mxu0
    %1468 = vdwg.mxu0
    %v1469 = vadd.f32 %v1395, %v1466
    %v1470 = vtanh.pop %v1469
    %v1471 = vld [vmem:[%s8] sm:$0xff]
    %v1472 = vld [vmem:[%s8 + $0x8] sm:$0xff]
    %v1473 = vld [vmem:[%s8 + $0x10] sm:$0xff]
    %v1474 = vld [vmem:[%s8 + $0x18] sm:$0xff]
    %v1475 = vld [vmem:[%s9] sm:$0x1]
    %v1477 = vlaneseq
    %v1478 = vshrl.u32 %v1477, 7
    %v1479 = vsub.s32 0, %v1478
    %v1480 = vrot.slane %v1475, %v1479
    %v1483 = vsel %vm79, %v1470, 0
    %1485 = vmatprep.subr.mxu0 0.0
    %1486 = vmatpush1.msra.mxu0 %v1471
    %1487 = vmatprep.subr.mxu0 0.0
    %1488 = vmatpush1.msra.mxu0 %v1472
    %1489 = vmatprep.subr.mxu0 0.0
    %1490 = vmatpush1.msra.mxu0 %v1473
    %1491 = vmatprep.subr.mxu0 0.0
    %1492 = vmatpush1.msra.mxu0 %v1474
    %1493 = vmatprep.subr.mxu0 0.0
    %1494 = vmatpush1.msra.mxu0 0.0
    %1495 = vmatprep.subr.mxu0 0.0
    %1496 = vmatpush1.msra.mxu0 0.0
    %1497 = vmatprep.subr.mxu0 0.0
    %1498 = vmatpush1.msra.mxu0 0.0
    %1499 = vmatprep.subr.mxu0 0.0
    %1500 = vmatpush1.msra.mxu0 0.0
    %1501 = vmatprep.subr.mxu0 0.0
    %1502 = vmatpush1.msra.mxu0 0.0
    %1503 = vmatprep.subr.mxu0 0.0
    %1504 = vmatpush1.msra.mxu0 0.0
    %1505 = vmatprep.subr.mxu0 0.0
    %1506 = vmatpush1.msra.mxu0 0.0
    %1507 = vmatprep.subr.mxu0 0.0
    %1508 = vmatpush1.msra.mxu0 0.0
    %1509 = vmatprep.subr.mxu0 0.0
    %1510 = vmatpush1.msra.mxu0 0.0
    %1511 = vmatprep.subr.mxu0 0.0
    %1512 = vmatpush1.msra.mxu0 0.0
    %1513 = vmatprep.subr.mxu0 0.0
    %1514 = vmatpush1.msra.mxu0 0.0
    %1515 = vmatprep.subr.mxu0 0.0
    %1516 = vmatpush1.msra.mxu0 0.0
    %1517 = vmatprep.subr.mxu0 0.0
    %1518 = vmatpush1.msra.mxu0 0.0
    %1519 = vmatprep.subr.mxu0 0.0
    %1520 = vmatpush1.msra.mxu0 0.0
    %1521 = vmatprep.subr.mxu0 0.0
    %1522 = vmatpush1.msra.mxu0 0.0
    %1523 = vmatprep.subr.mxu0 0.0
    %1524 = vmatpush1.msra.mxu0 0.0
    %1525 = vmatprep.subr.mxu0 0.0
    %1526 = vmatpush1.msra.mxu0 0.0
    %1527 = vmatprep.subr.mxu0 0.0
    %1528 = vmatpush1.msra.mxu0 0.0
    %1529 = vmatprep.subr.mxu0 0.0
    %1530 = vmatpush1.msra.mxu0 0.0
    %1531 = vmatprep.subr.mxu0 0.0
    %1532 = vmatpush1.msra.mxu0 0.0
    %1533 = vmatprep.subr.mxu0 0.0
    %1534 = vmatpush1.msra.mxu0 0.0
    %1535 = vmatprep.subr.mxu0 0.0
    %1536 = vmatpush1.msra.mxu0 0.0
    %1537 = vmatprep.subr.mxu0 0.0
    %1538 = vmatpush1.msra.mxu0 0.0
    %1539 = vmatprep.subr.mxu0 0.0
    %1540 = vmatpush1.msra.mxu0 0.0
    %1541 = vmatprep.subr.mxu0 0.0
    %1542 = vmatpush1.msra.mxu0 0.0
    %1543 = vmatprep.subr.mxu0 0.0
    %1544 = vmatpush1.msra.mxu0 0.0
    %1545 = vmatprep.subr.mxu0 0.0
    %1546 = vmatpush1.msra.mxu0 0.0
    %1547 = vmatprep.subr.mxu0 0.0
    %1548 = vmatpush1.msra.mxu0 0.0
    %1549 = vmatprep.mubr.f32.mxu0 0.0
    %1550 = vmatmul.mubr.f32.gmra.mrb[0].mxu0 %v1483
    %v1551 = vpop.f32.mrb[0].mxu0
    %v1552 = vadd.f32 %v1480, %v1551
    %v1553 = vpop.f32.mrb[0].mxu0
    %1554 = vdwg.mxu0
    %v1555 = vxor.u32 %v1552, 2147483648
    %v1556 = vmul.f32 %v1555, 1.442695
    %v1557 = vpow.pop %v1556
    %v1558 = vadd.f32 %v1557, 1.0
    %v1559 = vrcp.pop %v1558
    %v1560 = vmul.f32 1.0, %v1559
    %vm1561 = vcmask 15360
    %1562 = vst.msk [vmem:[%s10] sm:$0xff] %vm1561, %v1560
    // Predicated region
    $region53: #{nsmc_forward.1} parent=1 // pred_check
      _
    $region54: #{nsmc_forward.1} parent=1 // pred_check_branch
      %1564 = sbr.rel (0) target = $region56
    $region55: #{nsmc_forward.1} parent=1 // pred_region
      _
    $region56: #{nsmc_forward.1} parent=1 // pred_fallthru
      _
    // Predicated region
    $region57: #{nsmc_forward.1} parent=1 // pred_check
      _
    $region58: #{nsmc_forward.1} parent=1 // pred_check_branch
      %1566 = sbr.rel (0) target = $region60
    $region59: #{nsmc_forward.1} parent=1 // pred_region
      _
    $region60: #{nsmc_forward.1} parent=1 // pred_fallthru
      _
    %1567 = vsyncpa [#allocation6], 1

</llo_original>
